<compile_context>
chip_gen: v7x
topology: tpu7x:2x2x1
jax: 0.10.0
libtpu: 0.0.40
codegen_flags: <defaults>
</compile_context>

<pallas_src>
import jax
import jax.numpy as jnp
import numpy as np
from jax import lax
from jax.experimental import pallas as pl
from jax.experimental.pallas import tpu as pltpu

HIDDEN_SIZE = 64
INPUT_SIZE = 8
NUM_CLASSES = 2
NUM_LAYERS = 2


# ----------------------------------------------------------------------------
# Fused Pallas kernel
# ----------------------------------------------------------------------------
def lstm_net_kernel(x_ref, wih1_ref, whh1_ref, b1_ref,
                    w2_ref, b2_ref, wfc_ref, bfc_ref,
                    out_ref, gx_scr):
    """Fused 2-layer LSTM + Linear + softmax.

    x_ref:    (T*B, D)   time-major input, flattened over (T, B), B padded to 8
    wih1_ref: (D, 4H)    layer-1 input->hidden weight, gate cols [i, f, o, g]
    whh1_ref: (H, 4H)    layer-1 hidden->hidden weight, gate cols [i, f, o, g]
    b1_ref:   (1, 4H)    layer-1 b_ih + b_hh
    w2_ref:   (2H, 4H)   layer-2 stacked [wih2; whh2], gate cols [i, f, o, g]
    b2_ref:   (1, 4H)    layer-2 b_ih + b_hh
    wfc_ref:  (H, C)     FC weight, transposed
    bfc_ref:  (1, C)
    out_ref:  (B, C)     softmax probabilities
    gx_scr:   (T*B, 4H)  VMEM scratch: hoisted layer-1 input projection
    """
    B = out_ref.shape[0]
    H = whh1_ref.shape[0]
    T = x_ref.shape[0] // B

    # Hoisted layer-1 input projection: one matmul covers every timestep, so the
    # recurrence only carries the truly serial h @ W_hh matmuls.
    gx_scr[...] = (
        jnp.dot(x_ref[...], wih1_ref[...], preferred_element_type=jnp.float32)
        + b1_ref[...]
    )

    def gate_act(gates):
        # Gate column order [i, f, o, g]: one sigmoid over the first 3H lanes,
        # one tanh over the last H lanes (fewer, wider EUP pushes).
        sig = jax.nn.sigmoid(gates[:, : 3 * H])
        i = sig[:, :H]
        f = sig[:, H:2 * H]
        o = sig[:, 2 * H:]
        g = jnp.tanh(gates[:, 3 * H:])
        return i, f, o, g

    # ---- peeled t = 0: h and c are exactly zero, skip recurrent matmuls ----
    g1 = gx_scr[pl.ds(0, B), :]                                 # no h1 @ whh1
    i, _, o, g = gate_act(g1)
    c1 = i * g                                                  # f * 0 dropped
    h1 = o * jnp.tanh(c1)

    # h2 == 0, so only the wih2 rows of the stacked layer-2 weight contribute.
    g2 = (jnp.dot(h1, w2_ref[pl.ds(0, H), :],
                  preferred_element_type=jnp.float32)
          + b2_ref[...])
    i, _, o, g = gate_act(g2)
    c2 = i * g
    h2 = o * jnp.tanh(c2)

    # ---- remaining steps, fully unrolled (T static); weights re-read from ----
    # ---- refs each step to keep vreg live ranges short under full unroll. ----
    for t in range(1, T):
        g1 = (gx_scr[pl.ds(t * B, B), :]
              + jnp.dot(h1, whh1_ref[...], preferred_element_type=jnp.float32))
        i, f, o, g = gate_act(g1)
        c1 = f * c1 + i * g
        h1 = o * jnp.tanh(c1)

        # Single fused layer-2 matmul: concat(h1, h2) is (B, 2H) = one vreg of
        # lanes, against the stacked (2H, 4H) weight.
        h12 = jnp.concatenate([h1, h2], axis=1)
        g2 = (jnp.dot(h12, w2_ref[...], preferred_element_type=jnp.float32)
              + b2_ref[...])
        i, f, o, g = gate_act(g2)
        c2 = f * c2 + i * g
        h2 = o * jnp.tanh(c2)

    # FC + softmax on the final hidden state of layer 2 (== out[:, -1, :]).
    logits = (
        jnp.dot(h2, wfc_ref[...], preferred_element_type=jnp.float32)
        + bfc_ref[...]
    )
    m = jnp.max(logits, axis=1, keepdims=True)
    e = jnp.exp(logits - m)
    out_ref[...] = e / jnp.sum(e, axis=1, keepdims=True)


# ----------------------------------------------------------------------------
# Wrapper
# ----------------------------------------------------------------------------
_VMEM_SPEC = pl.BlockSpec(memory_space=pltpu.MemorySpace.VMEM)


def _permute_gates(w):
    """Reorder PyTorch gate blocks [i, f, g, o] -> [i, f, o, g] along axis 0."""
    H = HIDDEN_SIZE
    return jnp.concatenate([w[: 2 * H], w[3 * H:], w[2 * H: 3 * H]], axis=0)


def prepare_params(params):
    """One-time weight preprocessing (kept off the per-call inference path)."""
    p1, p2 = params["lstm"]
    wih1 = _permute_gates(p1["w_ih"]).T.astype(jnp.float32)                     # (D, 4H)
    whh1 = _permute_gates(p1["w_hh"]).T.astype(jnp.float32)                     # (H, 4H)
    b1 = _permute_gates(p1["b_ih"] + p1["b_hh"]).reshape(1, -1).astype(jnp.float32)
    wih2 = _permute_gates(p2["w_ih"]).T.astype(jnp.float32)                     # (H, 4H)
    whh2 = _permute_gates(p2["w_hh"]).T.astype(jnp.float32)                     # (H, 4H)
    w2 = jnp.concatenate([wih2, whh2], axis=0)                                  # (2H, 4H)
    b2 = _permute_gates(p2["b_ih"] + p2["b_hh"]).reshape(1, -1).astype(jnp.float32)
    wfc = params["fc"]["w"].T.astype(jnp.float32)                               # (H, C)
    bfc = params["fc"]["b"].reshape(1, -1).astype(jnp.float32)                  # (1, C)
    return {"wih1": wih1, "whh1": whh1, "b1": b1,
            "w2": w2, "b2": b2, "wfc": wfc, "bfc": bfc}


@jax.jit
def lstm_net_forward(x_btd, prep):
    """Forward pass matching LSTMNet.forward.  x_btd: (B, T, D) batch_first."""
    B, T, D = x_btd.shape
    B_pad = ((B + 7) // 8) * 8          # sublane-align the batch
    x = x_btd.astype(jnp.float32)
    if B_pad != B:
        x = jnp.concatenate(
            [x, jnp.zeros((B_pad - B, T, D), jnp.float32)], axis=0)
    x_tbd = jnp.transpose(x, (1, 0, 2))                      # (T, B_pad, D)
    x2d = x_tbd.reshape(T * B_pad, D)                        # time-major, flat

    H = prep["whh1"].shape[0]
    C = prep["wfc"].shape[1]

    out = pl.pallas_call(
        lstm_net_kernel,
        out_shape=jax.ShapeDtypeStruct((B_pad, C), jnp.float32),
        in_specs=[_VMEM_SPEC] * 8,
        out_specs=_VMEM_SPEC,
        scratch_shapes=[pltpu.VMEM((T * B_pad, 4 * H), jnp.float32)],
    )(x2d, prep["wih1"], prep["whh1"], prep["b1"],
      prep["w2"], prep["b2"], prep["wfc"], prep["bfc"])
    return out[:B]                       # drop padded batch rows


# ----------------------------------------------------------------------------
# Pure-JAX reference (independent: standard PyTorch gate order, lax.scan)
# ----------------------------------------------------------------------------
def lstm_net_reference(x_btd, params):
    B = x_btd.shape[0]
    out = jnp.transpose(x_btd, (1, 0, 2)).astype(jnp.float32)     # (T, B, D)
    for layer in range(NUM_LAYERS):
        p = params["lstm"][layer]
        H = p["w_hh"].shape[1]
        wih_t, whh_t = p["w_ih"].T, p["w_hh"].T
        b = (p["b_ih"] + p["b_hh"])[None, :]

        def step(carry, x_t):
            h, c = carry
            gates = x_t @ wih_t + h @ whh_t + b
            i = jax.nn.sigmoid(gates[:, 0 * H:1 * H])
            f = jax.nn.sigmoid(gates[:, 1 * H:2 * H])
            g = jnp.tanh(gates[:, 2 * H:3 * H])
            o = jax.nn.sigmoid(gates[:, 3 * H:4 * H])
            c_new = f * c + i * g
            h_new = o * jnp.tanh(c_new)
            return (h_new, c_new), h_new

        init = (jnp.zeros((B, H), jnp.float32), jnp.zeros((B, H), jnp.float32))
        _, out = lax.scan(step, init, out)
    logits = out[-1] @ params["fc"]["w"].T + params["fc"]["b"]
    return jax.nn.softmax(logits, axis=1)


# ----------------------------------------------------------------------------
# Deterministic parameter init (PyTorch-style uniform(-1/sqrt(H), 1/sqrt(H)))
# ----------------------------------------------------------------------------
def init_params(key):
    k = 1.0 / np.sqrt(HIDDEN_SIZE)
    params = {"lstm": [], "fc": {}}
    for layer in range(NUM_LAYERS):
        d_in = INPUT_SIZE if layer == 0 else HIDDEN_SIZE
        key, k1, k2, k3, k4 = jax.random.split(key, 5)
        params["lstm"].append({
            "w_ih": jax.random.uniform(k1, (4 * HIDDEN_SIZE, d_in), jnp.float32, -k, k),
            "w_hh": jax.random.uniform(k2, (4 * HIDDEN_SIZE, HIDDEN_SIZE), jnp.float32, -k, k),
            "b_ih": jax.random.uniform(k3, (4 * HIDDEN_SIZE,), jnp.float32, -k, k),
            "b_hh": jax.random.uniform(k4, (4 * HIDDEN_SIZE,), jnp.float32, -k, k),
        })
    key, k1, k2 = jax.random.split(key, 3)
    kf = 1.0 / np.sqrt(HIDDEN_SIZE)
    params["fc"]["w"] = jax.random.uniform(k1, (NUM_CLASSES, HIDDEN_SIZE), jnp.float32, -kf, kf)
    params["fc"]["b"] = jax.random.uniform(k2, (NUM_CLASSES,), jnp.float32, -kf, kf)
    return params


if __name__ == "__main__":
    key = jax.random.PRNGKey(0)
    key_x, key_p = jax.random.split(key)

    batch, seq = 2, 8
    x = jax.random.normal(key_x, (batch, seq, INPUT_SIZE), jnp.float32)  # (B, T, D)
    params = init_params(key_p)

    prep = jax.tree_util.tree_map(jax.block_until_ready, prepare_params(params))

    probs = jax.block_until_ready(lstm_net_forward(x, prep))
    assert probs.shape == (batch, NUM_CLASSES)

    ref = jax.block_until_ready(lstm_net_reference(x, params))
    np.testing.assert_allclose(np.asarray(probs), np.asarray(ref), atol=1e-4, rtol=1e-4)
    # rows of a softmax sum to 1
    np.testing.assert_allclose(np.asarray(probs).sum(axis=1), np.ones(batch), atol=1e-5)

    print("KERNEL_OK")
</pallas_src>

<mosaic_0001>
module attributes {stable_mosaic.version = 11 : i64} {
  func.func @lstm_net_kernel(%arg0: memref<64x8xf32, #tpu.memory_space<vmem>>, %arg1: memref<8x256xf32, #tpu.memory_space<vmem>>, %arg2: memref<64x256xf32, #tpu.memory_space<vmem>>, %arg3: memref<1x256xf32, #tpu.memory_space<vmem>>, %arg4: memref<128x256xf32, #tpu.memory_space<vmem>>, %arg5: memref<1x256xf32, #tpu.memory_space<vmem>>, %arg6: memref<64x2xf32, #tpu.memory_space<vmem>>, %arg7: memref<1x2xf32, #tpu.memory_space<vmem>>, %arg8: memref<8x2xf32, #tpu.memory_space<vmem>>, %arg9: memref<64x256xf32, #tpu.memory_space<vmem>>) attributes {dimension_semantics = [], scalar_prefetch = 0 : i64, scratch_operands = 1 : i64, tpu.core_type = #tpu.core_type<tc>} {
    %c0 = arith.constant 0 : index
    %c0_0 = arith.constant 0 : index
    %0 = vector.load %arg0[%c0, %c0_0] : memref<64x8xf32, #tpu.memory_space<vmem>>, vector<64x8xf32>
    %c0_1 = arith.constant 0 : index
    %c0_2 = arith.constant 0 : index
    %1 = vector.load %arg1[%c0_1, %c0_2] : memref<8x256xf32, #tpu.memory_space<vmem>>, vector<8x256xf32>
    %cst = arith.constant dense<0.000000e+00> : vector<64x256xf32>
    %2 = tpu.matmul %0, %1, %cst {dimension_numbers = #tpu.dot_dimension_numbers<[1], [0], [0], [1], [0, 0, 1, 1], [], []>} : vector<64x8xf32>, vector<8x256xf32>, vector<64x256xf32> -> vector<64x256xf32>
    %c0_3 = arith.constant 0 : index
    %c0_4 = arith.constant 0 : index
    %3 = vector.load %arg3[%c0_3, %c0_4] : memref<1x256xf32, #tpu.memory_space<vmem>>, vector<1x256xf32>
    %4 = vector.broadcast %3 : vector<1x256xf32> to vector<64x256xf32>
    %5 = arith.addf %2, %4 : vector<64x256xf32>
    %c0_5 = arith.constant 0 : index
    %c0_6 = arith.constant 0 : index
    %6 = vector.load %arg9[%c0_5, %c0_6] : memref<64x256xf32, #tpu.memory_space<vmem>>, vector<64x256xf32>
    tpu.vector_store %arg9[%c0_5, %c0_6], %5 {strides = array<i32>} : memref<64x256xf32, #tpu.memory_space<vmem>>, vector<64x256xf32>,
    %c0_7 = arith.constant 0 : index
    %c0_8 = arith.constant 0 : index
    %7 = vector.load %arg9[%c0_7, %c0_8] : memref<64x256xf32, #tpu.memory_space<vmem>>, vector<8x256xf32>
    %8 = vector.extract_strided_slice %7 {offsets = [0, 0], sizes = [8, 192], strides = [1, 1]} : vector<8x256xf32> to vector<8x192xf32>
    %9 = arith.negf %8 : vector<8x192xf32>
    %10 = math.exp %9 : vector<8x192xf32>
    %cst_9 = arith.constant 1.000000e+00 : f32
    %11 = vector.broadcast %cst_9 : f32 to vector<8x192xf32>
    %12 = arith.addf %11, %10 : vector<8x192xf32>
    %13 = arith.divf %11, %12 : vector<8x192xf32>
    %14 = vector.extract_strided_slice %13 {offsets = [0, 0], sizes = [8, 64], strides = [1, 1]} : vector<8x192xf32> to vector<8x64xf32>
    %15 = vector.extract_strided_slice %13 {offsets = [0, 128], sizes = [8, 64], strides = [1, 1]} : vector<8x192xf32> to vector<8x64xf32>
    %16 = vector.extract_strided_slice %7 {offsets = [0, 192], sizes = [8, 64], strides = [1, 1]} : vector<8x256xf32> to vector<8x64xf32>
    %17 = math.tanh %16 : vector<8x64xf32>
    %18 = arith.mulf %14, %17 : vector<8x64xf32>
    %19 = math.tanh %18 : vector<8x64xf32>
    %20 = arith.mulf %15, %19 : vector<8x64xf32>
    %c0_10 = arith.constant 0 : index
    %c0_11 = arith.constant 0 : index
    %21 = vector.load %arg4[%c0_10, %c0_11] : memref<128x256xf32, #tpu.memory_space<vmem>>, vector<64x256xf32>
    %cst_12 = arith.constant dense<0.000000e+00> : vector<8x256xf32>
    %22 = tpu.matmul %20, %21, %cst_12 {dimension_numbers = #tpu.dot_dimension_numbers<[1], [0], [0], [1], [0, 0, 1, 1], [], []>} : vector<8x64xf32>, vector<64x256xf32>, vector<8x256xf32> -> vector<8x256xf32>
    %c0_13 = arith.constant 0 : index
    %c0_14 = arith.constant 0 : index
    %23 = vector.load %arg5[%c0_13, %c0_14] : memref<1x256xf32, #tpu.memory_space<vmem>>, vector<1x256xf32>
    %24 = vector.broadcast %23 : vector<1x256xf32> to vector<8x256xf32>
    %25 = arith.addf %22, %24 : vector<8x256xf32>
    %26 = vector.extract_strided_slice %25 {offsets = [0, 0], sizes = [8, 192], strides = [1, 1]} : vector<8x256xf32> to vector<8x192xf32>
    %27 = arith.negf %26 : vector<8x192xf32>
    %28 = math.exp %27 : vector<8x192xf32>
    %cst_15 = arith.constant 1.000000e+00 : f32
    %29 = vector.broadcast %cst_15 : f32 to vector<8x192xf32>
    %30 = arith.addf %29, %28 : vector<8x192xf32>
    %31 = arith.divf %29, %30 : vector<8x192xf32>
    %32 = vector.extract_strided_slice %31 {offsets = [0, 0], sizes = [8, 64], strides = [1, 1]} : vector<8x192xf32> to vector<8x64xf32>
    %33 = vector.extract_strided_slice %31 {offsets = [0, 128], sizes = [8, 64], strides = [1, 1]} : vector<8x192xf32> to vector<8x64xf32>
    %34 = vector.extract_strided_slice %25 {offsets = [0, 192], sizes = [8, 64], strides = [1, 1]} : vector<8x256xf32> to vector<8x64xf32>
    %35 = math.tanh %34 : vector<8x64xf32>
    %36 = arith.mulf %32, %35 : vector<8x64xf32>
    %37 = math.tanh %36 : vector<8x64xf32>
    %38 = arith.mulf %33, %37 : vector<8x64xf32>
    %c8 = arith.constant 8 : index
    %c0_16 = arith.constant 0 : index
    %39 = vector.load %arg9[%c8, %c0_16] : memref<64x256xf32, #tpu.memory_space<vmem>>, vector<8x256xf32>
    %c0_17 = arith.constant 0 : index
    %c0_18 = arith.constant 0 : index
    %40 = vector.load %arg2[%c0_17, %c0_18] : memref<64x256xf32, #tpu.memory_space<vmem>>, vector<64x256xf32>
    %cst_19 = arith.constant dense<0.000000e+00> : vector<8x256xf32>
    %41 = tpu.matmul %20, %40, %cst_19 {dimension_numbers = #tpu.dot_dimension_numbers<[1], [0], [0], [1], [0, 0, 1, 1], [], []>} : vector<8x64xf32>, vector<64x256xf32>, vector<8x256xf32> -> vector<8x256xf32>
    %42 = arith.addf %39, %41 : vector<8x256xf32>
    %43 = vector.extract_strided_slice %42 {offsets = [0, 0], sizes = [8, 192], strides = [1, 1]} : vector<8x256xf32> to vector<8x192xf32>
    %44 = arith.negf %43 : vector<8x192xf32>
    %45 = math.exp %44 : vector<8x192xf32>
    %cst_20 = arith.constant 1.000000e+00 : f32
    %46 = vector.broadcast %cst_20 : f32 to vector<8x192xf32>
    %47 = arith.addf %46, %45 : vector<8x192xf32>
    %48 = arith.divf %46, %47 : vector<8x192xf32>
    %49 = vector.extract_strided_slice %48 {offsets = [0, 0], sizes = [8, 64], strides = [1, 1]} : vector<8x192xf32> to vector<8x64xf32>
    %50 = vector.extract_strided_slice %48 {offsets = [0, 64], sizes = [8, 64], strides = [1, 1]} : vector<8x192xf32> to vector<8x64xf32>
    %51 = vector.extract_strided_slice %48 {offsets = [0, 128], sizes = [8, 64], strides = [1, 1]} : vector<8x192xf32> to vector<8x64xf32>
    %52 = vector.extract_strided_slice %42 {offsets = [0, 192], sizes = [8, 64], strides = [1, 1]} : vector<8x256xf32> to vector<8x64xf32>
    %53 = math.tanh %52 : vector<8x64xf32>
    %54 = arith.mulf %50, %18 : vector<8x64xf32>
    %55 = arith.mulf %49, %53 : vector<8x64xf32>
    %56 = arith.addf %54, %55 : vector<8x64xf32>
    %57 = math.tanh %56 : vector<8x64xf32>
    %58 = arith.mulf %51, %57 : vector<8x64xf32>
    %59 = tpu.concatenate %58, %38 in 1 : vector<8x64xf32>, vector<8x64xf32> -> vector<8x128xf32>
    %c0_21 = arith.constant 0 : index
    %c0_22 = arith.constant 0 : index
    %60 = vector.load %arg4[%c0_21, %c0_22] : memref<128x256xf32, #tpu.memory_space<vmem>>, vector<128x256xf32>
    %cst_23 = arith.constant dense<0.000000e+00> : vector<8x256xf32>
    %61 = tpu.matmul %59, %60, %cst_23 {dimension_numbers = #tpu.dot_dimension_numbers<[1], [0], [0], [1], [0, 0, 1, 1], [], []>} : vector<8x128xf32>, vector<128x256xf32>, vector<8x256xf32> -> vector<8x256xf32>
    %c0_24 = arith.constant 0 : index
    %c0_25 = arith.constant 0 : index
    %62 = vector.load %arg5[%c0_24, %c0_25] : memref<1x256xf32, #tpu.memory_space<vmem>>, vector<1x256xf32>
    %63 = vector.broadcast %62 : vector<1x256xf32> to vector<8x256xf32>
    %64 = arith.addf %61, %63 : vector<8x256xf32>
    %65 = vector.extract_strided_slice %64 {offsets = [0, 0], sizes = [8, 192], strides = [1, 1]} : vector<8x256xf32> to vector<8x192xf32>
    %66 = arith.negf %65 : vector<8x192xf32>
    %67 = math.exp %66 : vector<8x192xf32>
    %cst_26 = arith.constant 1.000000e+00 : f32
    %68 = vector.broadcast %cst_26 : f32 to vector<8x192xf32>
    %69 = arith.addf %68, %67 : vector<8x192xf32>
    %70 = arith.divf %68, %69 : vector<8x192xf32>
    %71 = vector.extract_strided_slice %70 {offsets = [0, 0], sizes = [8, 64], strides = [1, 1]} : vector<8x192xf32> to vector<8x64xf32>
    %72 = vector.extract_strided_slice %70 {offsets = [0, 64], sizes = [8, 64], strides = [1, 1]} : vector<8x192xf32> to vector<8x64xf32>
    %73 = vector.extract_strided_slice %70 {offsets = [0, 128], sizes = [8, 64], strides = [1, 1]} : vector<8x192xf32> to vector<8x64xf32>
    %74 = vector.extract_strided_slice %64 {offsets = [0, 192], sizes = [8, 64], strides = [1, 1]} : vector<8x256xf32> to vector<8x64xf32>
    %75 = math.tanh %74 : vector<8x64xf32>
    %76 = arith.mulf %72, %36 : vector<8x64xf32>
    %77 = arith.mulf %71, %75 : vector<8x64xf32>
    %78 = arith.addf %76, %77 : vector<8x64xf32>
    %79 = math.tanh %78 : vector<8x64xf32>
    %80 = arith.mulf %73, %79 : vector<8x64xf32>
    %c16 = arith.constant 16 : index
    %c0_27 = arith.constant 0 : index
    %81 = vector.load %arg9[%c16, %c0_27] : memref<64x256xf32, #tpu.memory_space<vmem>>, vector<8x256xf32>
    %c0_28 = arith.constant 0 : index
    %c0_29 = arith.constant 0 : index
    %82 = vector.load %arg2[%c0_28, %c0_29] : memref<64x256xf32, #tpu.memory_space<vmem>>, vector<64x256xf32>
    %cst_30 = arith.constant dense<0.000000e+00> : vector<8x256xf32>
    %83 = tpu.matmul %58, %82, %cst_30 {dimension_numbers = #tpu.dot_dimension_numbers<[1], [0], [0], [1], [0, 0, 1, 1], [], []>} : vector<8x64xf32>, vector<64x256xf32>, vector<8x256xf32> -> vector<8x256xf32>
    %84 = arith.addf %81, %83 : vector<8x256xf32>
    %85 = vector.extract_strided_slice %84 {offsets = [0, 0], sizes = [8, 192], strides = [1, 1]} : vector<8x256xf32> to vector<8x192xf32>
    %86 = arith.negf %85 : vector<8x192xf32>
    %87 = math.exp %86 : vector<8x192xf32>
    %cst_31 = arith.constant 1.000000e+00 : f32
    %88 = vector.broadcast %cst_31 : f32 to vector<8x192xf32>
    %89 = arith.addf %88, %87 : vector<8x192xf32>
    %90 = arith.divf %88, %89 : vector<8x192xf32>
    %91 = vector.extract_strided_slice %90 {offsets = [0, 0], sizes = [8, 64], strides = [1, 1]} : vector<8x192xf32> to vector<8x64xf32>
    %92 = vector.extract_strided_slice %90 {offsets = [0, 64], sizes = [8, 64], strides = [1, 1]} : vector<8x192xf32> to vector<8x64xf32>
    %93 = vector.extract_strided_slice %90 {offsets = [0, 128], sizes = [8, 64], strides = [1, 1]} : vector<8x192xf32> to vector<8x64xf32>
    %94 = vector.extract_strided_slice %84 {offsets = [0, 192], sizes = [8, 64], strides = [1, 1]} : vector<8x256xf32> to vector<8x64xf32>
    %95 = math.tanh %94 : vector<8x64xf32>
    %96 = arith.mulf %92, %56 : vector<8x64xf32>
    %97 = arith.mulf %91, %95 : vector<8x64xf32>
    %98 = arith.addf %96, %97 : vector<8x64xf32>
    %99 = math.tanh %98 : vector<8x64xf32>
    %100 = arith.mulf %93, %99 : vector<8x64xf32>
    %101 = tpu.concatenate %100, %80 in 1 : vector<8x64xf32>, vector<8x64xf32> -> vector<8x128xf32>
    %c0_32 = arith.constant 0 : index
    %c0_33 = arith.constant 0 : index
    %102 = vector.load %arg4[%c0_32, %c0_33] : memref<128x256xf32, #tpu.memory_space<vmem>>, vector<128x256xf32>
    %cst_34 = arith.constant dense<0.000000e+00> : vector<8x256xf32>
    %103 = tpu.matmul %101, %102, %cst_34 {dimension_numbers = #tpu.dot_dimension_numbers<[1], [0], [0], [1], [0, 0, 1, 1], [], []>} : vector<8x128xf32>, vector<128x256xf32>, vector<8x256xf32> -> vector<8x256xf32>
    %c0_35 = arith.constant 0 : index
    %c0_36 = arith.constant 0 : index
    %104 = vector.load %arg5[%c0_35, %c0_36] : memref<1x256xf32, #tpu.memory_space<vmem>>, vector<1x256xf32>
    %105 = vector.broadcast %104 : vector<1x256xf32> to vector<8x256xf32>
    %106 = arith.addf %103, %105 : vector<8x256xf32>
    %107 = vector.extract_strided_slice %106 {offsets = [0, 0], sizes = [8, 192], strides = [1, 1]} : vector<8x256xf32> to vector<8x192xf32>
    %108 = arith.negf %107 : vector<8x192xf32>
    %109 = math.exp %108 : vector<8x192xf32>
    %cst_37 = arith.constant 1.000000e+00 : f32
    %110 = vector.broadcast %cst_37 : f32 to vector<8x192xf32>
    %111 = arith.addf %110, %109 : vector<8x192xf32>
    %112 = arith.divf %110, %111 : vector<8x192xf32>
    %113 = vector.extract_strided_slice %112 {offsets = [0, 0], sizes = [8, 64], strides = [1, 1]} : vector<8x192xf32> to vector<8x64xf32>
    %114 = vector.extract_strided_slice %112 {offsets = [0, 64], sizes = [8, 64], strides = [1, 1]} : vector<8x192xf32> to vector<8x64xf32>
    %115 = vector.extract_strided_slice %112 {offsets = [0, 128], sizes = [8, 64], strides = [1, 1]} : vector<8x192xf32> to vector<8x64xf32>
    %116 = vector.extract_strided_slice %106 {offsets = [0, 192], sizes = [8, 64], strides = [1, 1]} : vector<8x256xf32> to vector<8x64xf32>
    %117 = math.tanh %116 : vector<8x64xf32>
    %118 = arith.mulf %114, %78 : vector<8x64xf32>
    %119 = arith.mulf %113, %117 : vector<8x64xf32>
    %120 = arith.addf %118, %119 : vector<8x64xf32>
    %121 = math.tanh %120 : vector<8x64xf32>
    %122 = arith.mulf %115, %121 : vector<8x64xf32>
    %c24 = arith.constant 24 : index
    %c0_38 = arith.constant 0 : index
    %123 = vector.load %arg9[%c24, %c0_38] : memref<64x256xf32, #tpu.memory_space<vmem>>, vector<8x256xf32>
    %c0_39 = arith.constant 0 : index
    %c0_40 = arith.constant 0 : index
    %124 = vector.load %arg2[%c0_39, %c0_40] : memref<64x256xf32, #tpu.memory_space<vmem>>, vector<64x256xf32>
    %cst_41 = arith.constant dense<0.000000e+00> : vector<8x256xf32>
    %125 = tpu.matmul %100, %124, %cst_41 {dimension_numbers = #tpu.dot_dimension_numbers<[1], [0], [0], [1], [0, 0, 1, 1], [], []>} : vector<8x64xf32>, vector<64x256xf32>, vector<8x256xf32> -> vector<8x256xf32>
    %126 = arith.addf %123, %125 : vector<8x256xf32>
    %127 = vector.extract_strided_slice %126 {offsets = [0, 0], sizes = [8, 192], strides = [1, 1]} : vector<8x256xf32> to vector<8x192xf32>
    %128 = arith.negf %127 : vector<8x192xf32>
    %129 = math.exp %128 : vector<8x192xf32>
    %cst_42 = arith.constant 1.000000e+00 : f32
    %130 = vector.broadcast %cst_42 : f32 to vector<8x192xf32>
    %131 = arith.addf %130, %129 : vector<8x192xf32>
    %132 = arith.divf %130, %131 : vector<8x192xf32>
    %133 = vector.extract_strided_slice %132 {offsets = [0, 0], sizes = [8, 64], strides = [1, 1]} : vector<8x192xf32> to vector<8x64xf32>
    %134 = vector.extract_strided_slice %132 {offsets = [0, 64], sizes = [8, 64], strides = [1, 1]} : vector<8x192xf32> to vector<8x64xf32>
    %135 = vector.extract_strided_slice %132 {offsets = [0, 128], sizes = [8, 64], strides = [1, 1]} : vector<8x192xf32> to vector<8x64xf32>
    %136 = vector.extract_strided_slice %126 {offsets = [0, 192], sizes = [8, 64], strides = [1, 1]} : vector<8x256xf32> to vector<8x64xf32>
    %137 = math.tanh %136 : vector<8x64xf32>
    %138 = arith.mulf %134, %98 : vector<8x64xf32>
    %139 = arith.mulf %133, %137 : vector<8x64xf32>
    %140 = arith.addf %138, %139 : vector<8x64xf32>
    %141 = math.tanh %140 : vector<8x64xf32>
    %142 = arith.mulf %135, %141 : vector<8x64xf32>
    %143 = tpu.concatenate %142, %122 in 1 : vector<8x64xf32>, vector<8x64xf32> -> vector<8x128xf32>
    %c0_43 = arith.constant 0 : index
    %c0_44 = arith.constant 0 : index
    %144 = vector.load %arg4[%c0_43, %c0_44] : memref<128x256xf32, #tpu.memory_space<vmem>>, vector<128x256xf32>
    %cst_45 = arith.constant dense<0.000000e+00> : vector<8x256xf32>
    %145 = tpu.matmul %143, %144, %cst_45 {dimension_numbers = #tpu.dot_dimension_numbers<[1], [0], [0], [1], [0, 0, 1, 1], [], []>} : vector<8x128xf32>, vector<128x256xf32>, vector<8x256xf32> -> vector<8x256xf32>
    %c0_46 = arith.constant 0 : index
    %c0_47 = arith.constant 0 : index
    %146 = vector.load %arg5[%c0_46, %c0_47] : memref<1x256xf32, #tpu.memory_space<vmem>>, vector<1x256xf32>
    %147 = vector.broadcast %146 : vector<1x256xf32> to vector<8x256xf32>
    %148 = arith.addf %145, %147 : vector<8x256xf32>
    %149 = vector.extract_strided_slice %148 {offsets = [0, 0], sizes = [8, 192], strides = [1, 1]} : vector<8x256xf32> to vector<8x192xf32>
    %150 = arith.negf %149 : vector<8x192xf32>
    %151 = math.exp %150 : vector<8x192xf32>
    %cst_48 = arith.constant 1.000000e+00 : f32
    %152 = vector.broadcast %cst_48 : f32 to vector<8x192xf32>
    %153 = arith.addf %152, %151 : vector<8x192xf32>
    %154 = arith.divf %152, %153 : vector<8x192xf32>
    %155 = vector.extract_strided_slice %154 {offsets = [0, 0], sizes = [8, 64], strides = [1, 1]} : vector<8x192xf32> to vector<8x64xf32>
    %156 = vector.extract_strided_slice %154 {offsets = [0, 64], sizes = [8, 64], strides = [1, 1]} : vector<8x192xf32> to vector<8x64xf32>
    %157 = vector.extract_strided_slice %154 {offsets = [0, 128], sizes = [8, 64], strides = [1, 1]} : vector<8x192xf32> to vector<8x64xf32>
    %158 = vector.extract_strided_slice %148 {offsets = [0, 192], sizes = [8, 64], strides = [1, 1]} : vector<8x256xf32> to vector<8x64xf32>
    %159 = math.tanh %158 : vector<8x64xf32>
    %160 = arith.mulf %156, %120 : vector<8x64xf32>
    %161 = arith.mulf %155, %159 : vector<8x64xf32>
    %162 = arith.addf %160, %161 : vector<8x64xf32>
    %163 = math.tanh %162 : vector<8x64xf32>
    %164 = arith.mulf %157, %163 : vector<8x64xf32>
    %c32 = arith.constant 32 : index
    %c0_49 = arith.constant 0 : index
    %165 = vector.load %arg9[%c32, %c0_49] : memref<64x256xf32, #tpu.memory_space<vmem>>, vector<8x256xf32>
    %c0_50 = arith.constant 0 : index
    %c0_51 = arith.constant 0 : index
    %166 = vector.load %arg2[%c0_50, %c0_51] : memref<64x256xf32, #tpu.memory_space<vmem>>, vector<64x256xf32>
    %cst_52 = arith.constant dense<0.000000e+00> : vector<8x256xf32>
    %167 = tpu.matmul %142, %166, %cst_52 {dimension_numbers = #tpu.dot_dimension_numbers<[1], [0], [0], [1], [0, 0, 1, 1], [], []>} : vector<8x64xf32>, vector<64x256xf32>, vector<8x256xf32> -> vector<8x256xf32>
    %168 = arith.addf %165, %167 : vector<8x256xf32>
    %169 = vector.extract_strided_slice %168 {offsets = [0, 0], sizes = [8, 192], strides = [1, 1]} : vector<8x256xf32> to vector<8x192xf32>
    %170 = arith.negf %169 : vector<8x192xf32>
    %171 = math.exp %170 : vector<8x192xf32>
    %cst_53 = arith.constant 1.000000e+00 : f32
    %172 = vector.broadcast %cst_53 : f32 to vector<8x192xf32>
    %173 = arith.addf %172, %171 : vector<8x192xf32>
    %174 = arith.divf %172, %173 : vector<8x192xf32>
    %175 = vector.extract_strided_slice %174 {offsets = [0, 0], sizes = [8, 64], strides = [1, 1]} : vector<8x192xf32> to vector<8x64xf32>
    %176 = vector.extract_strided_slice %174 {offsets = [0, 64], sizes = [8, 64], strides = [1, 1]} : vector<8x192xf32> to vector<8x64xf32>
    %177 = vector.extract_strided_slice %174 {offsets = [0, 128], sizes = [8, 64], strides = [1, 1]} : vector<8x192xf32> to vector<8x64xf32>
    %178 = vector.extract_strided_slice %168 {offsets = [0, 192], sizes = [8, 64], strides = [1, 1]} : vector<8x256xf32> to vector<8x64xf32>
    %179 = math.tanh %178 : vector<8x64xf32>
    %180 = arith.mulf %176, %140 : vector<8x64xf32>
    %181 = arith.mulf %175, %179 : vector<8x64xf32>
    %182 = arith.addf %180, %181 : vector<8x64xf32>
    %183 = math.tanh %182 : vector<8x64xf32>
    %184 = arith.mulf %177, %183 : vector<8x64xf32>
    %185 = tpu.concatenate %184, %164 in 1 : vector<8x64xf32>, vector<8x64xf32> -> vector<8x128xf32>
    %c0_54 = arith.constant 0 : index
    %c0_55 = arith.constant 0 : index
    %186 = vector.load %arg4[%c0_54, %c0_55] : memref<128x256xf32, #tpu.memory_space<vmem>>, vector<128x256xf32>
    %cst_56 = arith.constant dense<0.000000e+00> : vector<8x256xf32>
    %187 = tpu.matmul %185, %186, %cst_56 {dimension_numbers = #tpu.dot_dimension_numbers<[1], [0], [0], [1], [0, 0, 1, 1], [], []>} : vector<8x128xf32>, vector<128x256xf32>, vector<8x256xf32> -> vector<8x256xf32>
    %c0_57 = arith.constant 0 : index
    %c0_58 = arith.constant 0 : index
    %188 = vector.load %arg5[%c0_57, %c0_58] : memref<1x256xf32, #tpu.memory_space<vmem>>, vector<1x256xf32>
    %189 = vector.broadcast %188 : vector<1x256xf32> to vector<8x256xf32>
    %190 = arith.addf %187, %189 : vector<8x256xf32>
    %191 = vector.extract_strided_slice %190 {offsets = [0, 0], sizes = [8, 192], strides = [1, 1]} : vector<8x256xf32> to vector<8x192xf32>
    %192 = arith.negf %191 : vector<8x192xf32>
    %193 = math.exp %192 : vector<8x192xf32>
    %cst_59 = arith.constant 1.000000e+00 : f32
    %194 = vector.broadcast %cst_59 : f32 to vector<8x192xf32>
    %195 = arith.addf %194, %193 : vector<8x192xf32>
    %196 = arith.divf %194, %195 : vector<8x192xf32>
    %197 = vector.extract_strided_slice %196 {offsets = [0, 0], sizes = [8, 64], strides = [1, 1]} : vector<8x192xf32> to vector<8x64xf32>
    %198 = vector.extract_strided_slice %196 {offsets = [0, 64], sizes = [8, 64], strides = [1, 1]} : vector<8x192xf32> to vector<8x64xf32>
    %199 = vector.extract_strided_slice %196 {offsets = [0, 128], sizes = [8, 64], strides = [1, 1]} : vector<8x192xf32> to vector<8x64xf32>
    %200 = vector.extract_strided_slice %190 {offsets = [0, 192], sizes = [8, 64], strides = [1, 1]} : vector<8x256xf32> to vector<8x64xf32>
    %201 = math.tanh %200 : vector<8x64xf32>
    %202 = arith.mulf %198, %162 : vector<8x64xf32>
    %203 = arith.mulf %197, %201 : vector<8x64xf32>
    %204 = arith.addf %202, %203 : vector<8x64xf32>
    %205 = math.tanh %204 : vector<8x64xf32>
    %206 = arith.mulf %199, %205 : vector<8x64xf32>
    %c40 = arith.constant 40 : index
    %c0_60 = arith.constant 0 : index
    %207 = vector.load %arg9[%c40, %c0_60] : memref<64x256xf32, #tpu.memory_space<vmem>>, vector<8x256xf32>
    %c0_61 = arith.constant 0 : index
    %c0_62 = arith.constant 0 : index
    %208 = vector.load %arg2[%c0_61, %c0_62] : memref<64x256xf32, #tpu.memory_space<vmem>>, vector<64x256xf32>
    %cst_63 = arith.constant dense<0.000000e+00> : vector<8x256xf32>
    %209 = tpu.matmul %184, %208, %cst_63 {dimension_numbers = #tpu.dot_dimension_numbers<[1], [0], [0], [1], [0, 0, 1, 1], [], []>} : vector<8x64xf32>, vector<64x256xf32>, vector<8x256xf32> -> vector<8x256xf32>
    %210 = arith.addf %207, %209 : vector<8x256xf32>
    %211 = vector.extract_strided_slice %210 {offsets = [0, 0], sizes = [8, 192], strides = [1, 1]} : vector<8x256xf32> to vector<8x192xf32>
    %212 = arith.negf %211 : vector<8x192xf32>
    %213 = math.exp %212 : vector<8x192xf32>
    %cst_64 = arith.constant 1.000000e+00 : f32
    %214 = vector.broadcast %cst_64 : f32 to vector<8x192xf32>
    %215 = arith.addf %214, %213 : vector<8x192xf32>
    %216 = arith.divf %214, %215 : vector<8x192xf32>
    %217 = vector.extract_strided_slice %216 {offsets = [0, 0], sizes = [8, 64], strides = [1, 1]} : vector<8x192xf32> to vector<8x64xf32>
    %218 = vector.extract_strided_slice %216 {offsets = [0, 64], sizes = [8, 64], strides = [1, 1]} : vector<8x192xf32> to vector<8x64xf32>
    %219 = vector.extract_strided_slice %216 {offsets = [0, 128], sizes = [8, 64], strides = [1, 1]} : vector<8x192xf32> to vector<8x64xf32>
    %220 = vector.extract_strided_slice %210 {offsets = [0, 192], sizes = [8, 64], strides = [1, 1]} : vector<8x256xf32> to vector<8x64xf32>
    %221 = math.tanh %220 : vector<8x64xf32>
    %222 = arith.mulf %218, %182 : vector<8x64xf32>
    %223 = arith.mulf %217, %221 : vector<8x64xf32>
    %224 = arith.addf %222, %223 : vector<8x64xf32>
    %225 = math.tanh %224 : vector<8x64xf32>
    %226 = arith.mulf %219, %225 : vector<8x64xf32>
    %227 = tpu.concatenate %226, %206 in 1 : vector<8x64xf32>, vector<8x64xf32> -> vector<8x128xf32>
    %c0_65 = arith.constant 0 : index
    %c0_66 = arith.constant 0 : index
    %228 = vector.load %arg4[%c0_65, %c0_66] : memref<128x256xf32, #tpu.memory_space<vmem>>, vector<128x256xf32>
    %cst_67 = arith.constant dense<0.000000e+00> : vector<8x256xf32>
    %229 = tpu.matmul %227, %228, %cst_67 {dimension_numbers = #tpu.dot_dimension_numbers<[1], [0], [0], [1], [0, 0, 1, 1], [], []>} : vector<8x128xf32>, vector<128x256xf32>, vector<8x256xf32> -> vector<8x256xf32>
    %c0_68 = arith.constant 0 : index
    %c0_69 = arith.constant 0 : index
    %230 = vector.load %arg5[%c0_68, %c0_69] : memref<1x256xf32, #tpu.memory_space<vmem>>, vector<1x256xf32>
    %231 = vector.broadcast %230 : vector<1x256xf32> to vector<8x256xf32>
    %232 = arith.addf %229, %231 : vector<8x256xf32>
    %233 = vector.extract_strided_slice %232 {offsets = [0, 0], sizes = [8, 192], strides = [1, 1]} : vector<8x256xf32> to vector<8x192xf32>
    %234 = arith.negf %233 : vector<8x192xf32>
    %235 = math.exp %234 : vector<8x192xf32>
    %cst_70 = arith.constant 1.000000e+00 : f32
    %236 = vector.broadcast %cst_70 : f32 to vector<8x192xf32>
    %237 = arith.addf %236, %235 : vector<8x192xf32>
    %238 = arith.divf %236, %237 : vector<8x192xf32>
    %239 = vector.extract_strided_slice %238 {offsets = [0, 0], sizes = [8, 64], strides = [1, 1]} : vector<8x192xf32> to vector<8x64xf32>
    %240 = vector.extract_strided_slice %238 {offsets = [0, 64], sizes = [8, 64], strides = [1, 1]} : vector<8x192xf32> to vector<8x64xf32>
    %241 = vector.extract_strided_slice %238 {offsets = [0, 128], sizes = [8, 64], strides = [1, 1]} : vector<8x192xf32> to vector<8x64xf32>
    %242 = vector.extract_strided_slice %232 {offsets = [0, 192], sizes = [8, 64], strides = [1, 1]} : vector<8x256xf32> to vector<8x64xf32>
    %243 = math.tanh %242 : vector<8x64xf32>
    %244 = arith.mulf %240, %204 : vector<8x64xf32>
    %245 = arith.mulf %239, %243 : vector<8x64xf32>
    %246 = arith.addf %244, %245 : vector<8x64xf32>
    %247 = math.tanh %246 : vector<8x64xf32>
    %248 = arith.mulf %241, %247 : vector<8x64xf32>
    %c48 = arith.constant 48 : index
    %c0_71 = arith.constant 0 : index
    %249 = vector.load %arg9[%c48, %c0_71] : memref<64x256xf32, #tpu.memory_space<vmem>>, vector<8x256xf32>
    %c0_72 = arith.constant 0 : index
    %c0_73 = arith.constant 0 : index
    %250 = vector.load %arg2[%c0_72, %c0_73] : memref<64x256xf32, #tpu.memory_space<vmem>>, vector<64x256xf32>
    %cst_74 = arith.constant dense<0.000000e+00> : vector<8x256xf32>
    %251 = tpu.matmul %226, %250, %cst_74 {dimension_numbers = #tpu.dot_dimension_numbers<[1], [0], [0], [1], [0, 0, 1, 1], [], []>} : vector<8x64xf32>, vector<64x256xf32>, vector<8x256xf32> -> vector<8x256xf32>
    %252 = arith.addf %249, %251 : vector<8x256xf32>
    %253 = vector.extract_strided_slice %252 {offsets = [0, 0], sizes = [8, 192], strides = [1, 1]} : vector<8x256xf32> to vector<8x192xf32>
    %254 = arith.negf %253 : vector<8x192xf32>
    %255 = math.exp %254 : vector<8x192xf32>
    %cst_75 = arith.constant 1.000000e+00 : f32
    %256 = vector.broadcast %cst_75 : f32 to vector<8x192xf32>
    %257 = arith.addf %256, %255 : vector<8x192xf32>
    %258 = arith.divf %256, %257 : vector<8x192xf32>
    %259 = vector.extract_strided_slice %258 {offsets = [0, 0], sizes = [8, 64], strides = [1, 1]} : vector<8x192xf32> to vector<8x64xf32>
    %260 = vector.extract_strided_slice %258 {offsets = [0, 64], sizes = [8, 64], strides = [1, 1]} : vector<8x192xf32> to vector<8x64xf32>
    %261 = vector.extract_strided_slice %258 {offsets = [0, 128], sizes = [8, 64], strides = [1, 1]} : vector<8x192xf32> to vector<8x64xf32>
    %262 = vector.extract_strided_slice %252 {offsets = [0, 192], sizes = [8, 64], strides = [1, 1]} : vector<8x256xf32> to vector<8x64xf32>
    %263 = math.tanh %262 : vector<8x64xf32>
    %264 = arith.mulf %260, %224 : vector<8x64xf32>
    %265 = arith.mulf %259, %263 : vector<8x64xf32>
    %266 = arith.addf %264, %265 : vector<8x64xf32>
    %267 = math.tanh %266 : vector<8x64xf32>
    %268 = arith.mulf %261, %267 : vector<8x64xf32>
    %269 = tpu.concatenate %268, %248 in 1 : vector<8x64xf32>, vector<8x64xf32> -> vector<8x128xf32>
    %c0_76 = arith.constant 0 : index
    %c0_77 = arith.constant 0 : index
    %270 = vector.load %arg4[%c0_76, %c0_77] : memref<128x256xf32, #tpu.memory_space<vmem>>, vector<128x256xf32>
    %cst_78 = arith.constant dense<0.000000e+00> : vector<8x256xf32>
    %271 = tpu.matmul %269, %270, %cst_78 {dimension_numbers = #tpu.dot_dimension_numbers<[1], [0], [0], [1], [0, 0, 1, 1], [], []>} : vector<8x128xf32>, vector<128x256xf32>, vector<8x256xf32> -> vector<8x256xf32>
    %c0_79 = arith.constant 0 : index
    %c0_80 = arith.constant 0 : index
    %272 = vector.load %arg5[%c0_79, %c0_80] : memref<1x256xf32, #tpu.memory_space<vmem>>, vector<1x256xf32>
    %273 = vector.broadcast %272 : vector<1x256xf32> to vector<8x256xf32>
    %274 = arith.addf %271, %273 : vector<8x256xf32>
    %275 = vector.extract_strided_slice %274 {offsets = [0, 0], sizes = [8, 192], strides = [1, 1]} : vector<8x256xf32> to vector<8x192xf32>
    %276 = arith.negf %275 : vector<8x192xf32>
    %277 = math.exp %276 : vector<8x192xf32>
    %cst_81 = arith.constant 1.000000e+00 : f32
    %278 = vector.broadcast %cst_81 : f32 to vector<8x192xf32>
    %279 = arith.addf %278, %277 : vector<8x192xf32>
    %280 = arith.divf %278, %279 : vector<8x192xf32>
    %281 = vector.extract_strided_slice %280 {offsets = [0, 0], sizes = [8, 64], strides = [1, 1]} : vector<8x192xf32> to vector<8x64xf32>
    %282 = vector.extract_strided_slice %280 {offsets = [0, 64], sizes = [8, 64], strides = [1, 1]} : vector<8x192xf32> to vector<8x64xf32>
    %283 = vector.extract_strided_slice %280 {offsets = [0, 128], sizes = [8, 64], strides = [1, 1]} : vector<8x192xf32> to vector<8x64xf32>
    %284 = vector.extract_strided_slice %274 {offsets = [0, 192], sizes = [8, 64], strides = [1, 1]} : vector<8x256xf32> to vector<8x64xf32>
    %285 = math.tanh %284 : vector<8x64xf32>
    %286 = arith.mulf %282, %246 : vector<8x64xf32>
    %287 = arith.mulf %281, %285 : vector<8x64xf32>
    %288 = arith.addf %286, %287 : vector<8x64xf32>
    %289 = math.tanh %288 : vector<8x64xf32>
    %290 = arith.mulf %283, %289 : vector<8x64xf32>
    %c56 = arith.constant 56 : index
    %c0_82 = arith.constant 0 : index
    %291 = vector.load %arg9[%c56, %c0_82] : memref<64x256xf32, #tpu.memory_space<vmem>>, vector<8x256xf32>
    %c0_83 = arith.constant 0 : index
    %c0_84 = arith.constant 0 : index
    %292 = vector.load %arg2[%c0_83, %c0_84] : memref<64x256xf32, #tpu.memory_space<vmem>>, vector<64x256xf32>
    %cst_85 = arith.constant dense<0.000000e+00> : vector<8x256xf32>
    %293 = tpu.matmul %268, %292, %cst_85 {dimension_numbers = #tpu.dot_dimension_numbers<[1], [0], [0], [1], [0, 0, 1, 1], [], []>} : vector<8x64xf32>, vector<64x256xf32>, vector<8x256xf32> -> vector<8x256xf32>
    %294 = arith.addf %291, %293 : vector<8x256xf32>
    %295 = vector.extract_strided_slice %294 {offsets = [0, 0], sizes = [8, 192], strides = [1, 1]} : vector<8x256xf32> to vector<8x192xf32>
    %296 = arith.negf %295 : vector<8x192xf32>
    %297 = math.exp %296 : vector<8x192xf32>
    %cst_86 = arith.constant 1.000000e+00 : f32
    %298 = vector.broadcast %cst_86 : f32 to vector<8x192xf32>
    %299 = arith.addf %298, %297 : vector<8x192xf32>
    %300 = arith.divf %298, %299 : vector<8x192xf32>
    %301 = vector.extract_strided_slice %300 {offsets = [0, 0], sizes = [8, 64], strides = [1, 1]} : vector<8x192xf32> to vector<8x64xf32>
    %302 = vector.extract_strided_slice %300 {offsets = [0, 64], sizes = [8, 64], strides = [1, 1]} : vector<8x192xf32> to vector<8x64xf32>
    %303 = vector.extract_strided_slice %300 {offsets = [0, 128], sizes = [8, 64], strides = [1, 1]} : vector<8x192xf32> to vector<8x64xf32>
    %304 = vector.extract_strided_slice %294 {offsets = [0, 192], sizes = [8, 64], strides = [1, 1]} : vector<8x256xf32> to vector<8x64xf32>
    %305 = math.tanh %304 : vector<8x64xf32>
    %306 = arith.mulf %302, %266 : vector<8x64xf32>
    %307 = arith.mulf %301, %305 : vector<8x64xf32>
    %308 = arith.addf %306, %307 : vector<8x64xf32>
    %309 = math.tanh %308 : vector<8x64xf32>
    %310 = arith.mulf %303, %309 : vector<8x64xf32>
    %311 = tpu.concatenate %310, %290 in 1 : vector<8x64xf32>, vector<8x64xf32> -> vector<8x128xf32>
    %c0_87 = arith.constant 0 : index
    %c0_88 = arith.constant 0 : index
    %312 = vector.load %arg4[%c0_87, %c0_88] : memref<128x256xf32, #tpu.memory_space<vmem>>, vector<128x256xf32>
    %cst_89 = arith.constant dense<0.000000e+00> : vector<8x256xf32>
    %313 = tpu.matmul %311, %312, %cst_89 {dimension_numbers = #tpu.dot_dimension_numbers<[1], [0], [0], [1], [0, 0, 1, 1], [], []>} : vector<8x128xf32>, vector<128x256xf32>, vector<8x256xf32> -> vector<8x256xf32>
    %c0_90 = arith.constant 0 : index
    %c0_91 = arith.constant 0 : index
    %314 = vector.load %arg5[%c0_90, %c0_91] : memref<1x256xf32, #tpu.memory_space<vmem>>, vector<1x256xf32>
    %315 = vector.broadcast %314 : vector<1x256xf32> to vector<8x256xf32>
    %316 = arith.addf %313, %315 : vector<8x256xf32>
    %317 = vector.extract_strided_slice %316 {offsets = [0, 0], sizes = [8, 192], strides = [1, 1]} : vector<8x256xf32> to vector<8x192xf32>
    %318 = arith.negf %317 : vector<8x192xf32>
    %319 = math.exp %318 : vector<8x192xf32>
    %cst_92 = arith.constant 1.000000e+00 : f32
    %320 = vector.broadcast %cst_92 : f32 to vector<8x192xf32>
    %321 = arith.addf %320, %319 : vector<8x192xf32>
    %322 = arith.divf %320, %321 : vector<8x192xf32>
    %323 = vector.extract_strided_slice %322 {offsets = [0, 0], sizes = [8, 64], strides = [1, 1]} : vector<8x192xf32> to vector<8x64xf32>
    %324 = vector.extract_strided_slice %322 {offsets = [0, 64], sizes = [8, 64], strides = [1, 1]} : vector<8x192xf32> to vector<8x64xf32>
    %325 = vector.extract_strided_slice %322 {offsets = [0, 128], sizes = [8, 64], strides = [1, 1]} : vector<8x192xf32> to vector<8x64xf32>
    %326 = vector.extract_strided_slice %316 {offsets = [0, 192], sizes = [8, 64], strides = [1, 1]} : vector<8x256xf32> to vector<8x64xf32>
    %327 = math.tanh %326 : vector<8x64xf32>
    %328 = arith.mulf %324, %288 : vector<8x64xf32>
    %329 = arith.mulf %323, %327 : vector<8x64xf32>
    %330 = arith.addf %328, %329 : vector<8x64xf32>
    %331 = math.tanh %330 : vector<8x64xf32>
    %332 = arith.mulf %325, %331 : vector<8x64xf32>
    %c0_93 = arith.constant 0 : index
    %c0_94 = arith.constant 0 : index
    %333 = vector.load %arg6[%c0_93, %c0_94] : memref<64x2xf32, #tpu.memory_space<vmem>>, vector<64x2xf32>
    %cst_95 = arith.constant dense<0.000000e+00> : vector<8x2xf32>
    %334 = tpu.matmul %332, %333, %cst_95 {dimension_numbers = #tpu.dot_dimension_numbers<[1], [0], [0], [1], [0, 0, 1, 1], [], []>} : vector<8x64xf32>, vector<64x2xf32>, vector<8x2xf32> -> vector<8x2xf32>
    %c0_96 = arith.constant 0 : index
    %c0_97 = arith.constant 0 : index
    %335 = vector.load %arg7[%c0_96, %c0_97] : memref<1x2xf32, #tpu.memory_space<vmem>>, vector<1x2xf32>
    %336 = vector.broadcast %335 : vector<1x2xf32> to vector<8x2xf32>
    %337 = arith.addf %334, %336 : vector<8x2xf32>
    %cst_98 = arith.constant dense<0xFF800000> : vector<8xf32>
    %338 = vector.multi_reduction <maximumf>, %337, %cst_98 [1] : vector<8x2xf32> to vector<8xf32>
    %339 = vector.shape_cast %338 : vector<8xf32> to vector<8x1xf32>
    %340 = vector.broadcast %339 : vector<8x1xf32> to vector<8x2xf32>
    %341 = arith.subf %337, %340 : vector<8x2xf32>
    %342 = math.exp %341 : vector<8x2xf32>
    %cst_99 = arith.constant dense<0.000000e+00> : vector<8xf32>
    %343 = vector.multi_reduction <add>, %342, %cst_99 [1] : vector<8x2xf32> to vector<8xf32>
    %344 = vector.shape_cast %343 : vector<8xf32> to vector<8x1xf32>
    %345 = vector.broadcast %344 : vector<8x1xf32> to vector<8x2xf32>
    %346 = arith.divf %342, %345 : vector<8x2xf32>
    %c0_100 = arith.constant 0 : index
    %c0_101 = arith.constant 0 : index
    %347 = vector.load %arg8[%c0_100, %c0_101] : memref<8x2xf32, #tpu.memory_space<vmem>>, vector<8x2xf32>
    tpu.vector_store %arg8[%c0_100, %c0_101], %346 {strides = array<i32>} : memref<8x2xf32, #tpu.memory_space<vmem>>, vector<8x2xf32>,
    return
  }
}

</mosaic_0001>

<llo_original>
// kernel: lstm_net_forward.1
$region0: #{lstm_net_forward.1}
  #allocation0 [shape = 'u32[]', space=smem, size = 0x4, offset = 0x4, fixed_abs, tag = 'smem constant byte address 0x4 - core index']
  #allocation1 [shape = 'u32[144,128]{1,0:T(1,128)}', space=vmem, size = 0x12000, scoped, tag = 'internal scratch']
  #allocation2 [shape = 'f32[64,256]{1,0:T(8,128)}', space=vmem, size = 0x10000, scoped, tag = 'scratch operand']
  %s0 = inlined_call_operand.vmem [shape: f32[64,8], index: 0, kind: input, shape index: {}]
  %s1 = inlined_call_operand.vmem [shape: f32[8,256], index: 1, kind: input, shape index: {}]
  %s2 = inlined_call_operand.hbm [shape: f32[64,256], index: 2, kind: input, shape index: {}]
  %s3 = inlined_call_operand.vmem [shape: f32[1,256], index: 3, kind: input, shape index: {}]
  %s4 = inlined_call_operand.vmem [shape: f32[128,256], index: 4, kind: input, shape index: {}]
  %s5 = inlined_call_operand.vmem [shape: f32[1,256], index: 5, kind: input, shape index: {}]
  %s6 = inlined_call_operand.vmem [shape: f32[64,2], index: 6, kind: input, shape index: {}]
  %s7 = inlined_call_operand.vmem [shape: f32[1,2], index: 7, kind: input, shape index: {}]
  %s8 = inlined_call_operand.vmem [shape: f32[8,2], index: 8, kind: output, shape index: {}]
  %s9 = sld [smem:[#allocation0]]
  $region46: #{lstm_net_forward.1} parent=0
    _
  %s11 = ssub.s32 1, %s9
  %s12 = scalar_select 0, %s11, %s9
  $region1: #{lstm_net_forward.1} parent=0
    #allocation3 [shape = 'u8[65536]{0}', space=vmem, size = 0x10000, scoped, tag = 'input window, operand 2, single buffered']
    #allocation4 [shape = 's32[1]{0}', space=sflag, size = 0x4, scoped, tag = 'scoped memory for lstm_net_forward.1']
    %13 = vsyncpa [#allocation4], 0
    // Predicated region
    $region2: #{lstm_net_forward.1} parent=1 // pred_check
      _
    $region3: #{lstm_net_forward.1} parent=1 // pred_check_branch
      %15 = sbr.rel (0) target = $region5
    $region4: #{lstm_net_forward.1} parent=1 // pred_region
      _
    $region5: #{lstm_net_forward.1} parent=1 // pred_fallthru
      _
    // Predicated region
    $region6: #{lstm_net_forward.1} parent=1 // pred_check
      _
    $region7: #{lstm_net_forward.1} parent=1 // pred_check_branch
      %17 = sbr.rel (0) target = $region9
    $region8: #{lstm_net_forward.1} parent=1 // pred_region
      _
    $region9: #{lstm_net_forward.1} parent=1 // pred_fallthru
      _
    // Predicated region
    $region10: #{lstm_net_forward.1} parent=1 // pred_check
      _
    $region11: #{lstm_net_forward.1} parent=1 // pred_check_branch
      %19 = sbr.rel (0) target = $region13
    $region12: #{lstm_net_forward.1} parent=1 // pred_region
      %s21 = ssub.s32 2048, 2048
      %22 = vsyncadd [#allocation4], %s21
      %s23 = sshll.u32 [#allocation3], 4
      %s24 = int_to_ptr.vmem [resolvable:$true] %s23
      %29 = dma.hbm_to_vmem [thread:$0]  %s2, 2048, %s24, [#allocation4], 256, 256, 16
    $region13: #{lstm_net_forward.1} parent=1 // pred_fallthru
      _
    // Predicated region
    $region14: #{lstm_net_forward.1} parent=1 // pred_check
      _
    $region15: #{lstm_net_forward.1} parent=1 // pred_check_branch
      %31 = sbr.rel (0) target = $region17
    $region16: #{lstm_net_forward.1} parent=1 // pred_region
      _
    $region17: #{lstm_net_forward.1} parent=1 // pred_fallthru
      _
    // Predicated region
    $region18: #{lstm_net_forward.1} parent=1 // pred_check
      _
    $region19: #{lstm_net_forward.1} parent=1 // pred_check_branch
      %33 = sbr.rel (0) target = $region21
    $region20: #{lstm_net_forward.1} parent=1 // pred_region
      _
    $region21: #{lstm_net_forward.1} parent=1 // pred_fallthru
      _
    // Predicated region
    $region22: #{lstm_net_forward.1} parent=1 // pred_check
      _
    $region23: #{lstm_net_forward.1} parent=1 // pred_check_branch
      %35 = sbr.rel (0) target = $region25
    $region24: #{lstm_net_forward.1} parent=1 // pred_region
      _
    $region25: #{lstm_net_forward.1} parent=1 // pred_fallthru
      _
    // Predicated region
    $region26: #{lstm_net_forward.1} parent=1 // pred_check
      _
    $region27: #{lstm_net_forward.1} parent=1 // pred_check_branch
      %37 = sbr.rel (0) target = $region29
    $region28: #{lstm_net_forward.1} parent=1 // pred_region
      _
    $region29: #{lstm_net_forward.1} parent=1 // pred_fallthru
      _
    // Predicated region
    $region30: #{lstm_net_forward.1} parent=1 // pred_check
      _
    $region31: #{lstm_net_forward.1} parent=1 // pred_check_branch
      %39 = sbr.rel (0) target = $region33
    $region32: #{lstm_net_forward.1} parent=1 // pred_region
      _
    $region33: #{lstm_net_forward.1} parent=1 // pred_fallthru
      _
    // Predicated region
    $region34: #{lstm_net_forward.1} parent=1 // pred_check
      _
    $region35: #{lstm_net_forward.1} parent=1 // pred_check_branch
      %41 = sbr.rel (0) target = $region37
    $region36: #{lstm_net_forward.1} parent=1 // pred_region
      %42 = dma.done [#allocation4], 2048
    $region37: #{lstm_net_forward.1} parent=1 // pred_fallthru
      _
    %v43 = vld [vmem:[%s0] sm:$0xff]
    %v44 = vld [vmem:[%s0 + $0x8] sm:$0xff]
    %v45 = vld [vmem:[%s0 + $0x10] sm:$0xff]
    %v46 = vld [vmem:[%s0 + $0x18] sm:$0xff]
    %v47 = vld [vmem:[%s0 + $0x20] sm:$0xff]
    %v48 = vld [vmem:[%s0 + $0x28] sm:$0xff]
    %v49 = vld [vmem:[%s0 + $0x30] sm:$0xff]
    %v50 = vld [vmem:[%s0 + $0x38] sm:$0xff]
    %v51 = vld [vmem:[%s1] sm:$0xff]
    %v52 = vld [vmem:[%s1 + $0x8] sm:$0xff]
    %v53 = vld [vmem:[%s3] sm:$0x3]
    %v55 = vlaneseq
    %v56 = vshrl.u32 %v55, 7
    %v57 = vsub.s32 0, %v56
    %v58 = vrot.slane %v53, %v57
    %v59 = vlaneseq
    %v60 = vshrl.u32 %v59, 7
    %v61 = vsub.s32 1, %v60
    %v62 = vrot.slane %v53, %v61
    %vm65 = vcmask 64512
    %v67 = vsel %vm65, %v43, 0
    %v70 = vsel %vm65, %v44, 0
    %v73 = vsel %vm65, %v45, 0
    %v76 = vsel %vm65, %v46, 0
    %v79 = vsel %vm65, %v47, 0
    %v82 = vsel %vm65, %v48, 0
    %v85 = vsel %vm65, %v49, 0
    %v88 = vsel %vm65, %v50, 0
    %90 = vmatprep.subr.mxu0 %v52
    %91 = vmatpush1.msra.mxu0 %v51
    %92 = vmatprep.subr.mxu0 0.0
    %93 = vmatpush1.msra.mxu0 0.0
    %94 = vmatprep.subr.mxu0 0.0
    %95 = vmatpush1.msra.mxu0 0.0
    %96 = vmatprep.subr.mxu0 0.0
    %97 = vmatpush1.msra.mxu0 0.0
    %98 = vmatprep.subr.mxu0 0.0
    %99 = vmatpush1.msra.mxu0 0.0
    %100 = vmatprep.subr.mxu0 0.0
    %101 = vmatpush1.msra.mxu0 0.0
    %102 = vmatprep.subr.mxu0 0.0
    %103 = vmatpush1.msra.mxu0 0.0
    %104 = vmatprep.subr.mxu0 0.0
    %105 = vmatpush1.msra.mxu0 0.0
    %106 = vmatprep.subr.mxu0 0.0
    %107 = vmatpush1.msra.mxu0 0.0
    %108 = vmatprep.subr.mxu0 0.0
    %109 = vmatpush1.msra.mxu0 0.0
    %110 = vmatprep.subr.mxu0 0.0
    %111 = vmatpush1.msra.mxu0 0.0
    %112 = vmatprep.subr.mxu0 0.0
    %113 = vmatpush1.msra.mxu0 0.0
    %114 = vmatprep.subr.mxu0 0.0
    %115 = vmatpush1.msra.mxu0 0.0
    %116 = vmatprep.subr.mxu0 0.0
    %117 = vmatpush1.msra.mxu0 0.0
    %118 = vmatprep.subr.mxu0 0.0
    %119 = vmatpush1.msra.mxu0 0.0
    %120 = vmatprep.subr.mxu0 0.0
    %121 = vmatpush1.msra.mxu0 0.0
    %122 = vmatprep.subr.mxu0 0.0
    %123 = vmatpush1.msra.mxu0 0.0
    %124 = vmatprep.subr.mxu0 0.0
    %125 = vmatpush1.msra.mxu0 0.0
    %126 = vmatprep.subr.mxu0 0.0
    %127 = vmatpush1.msra.mxu0 0.0
    %128 = vmatprep.subr.mxu0 0.0
    %129 = vmatpush1.msra.mxu0 0.0
    %130 = vmatprep.subr.mxu0 0.0
    %131 = vmatpush1.msra.mxu0 0.0
    %132 = vmatprep.subr.mxu0 0.0
    %133 = vmatpush1.msra.mxu0 0.0
    %134 = vmatprep.subr.mxu0 0.0
    %135 = vmatpush1.msra.mxu0 0.0
    %136 = vmatprep.subr.mxu0 0.0
    %137 = vmatpush1.msra.mxu0 0.0
    %138 = vmatprep.subr.mxu0 0.0
    %139 = vmatpush1.msra.mxu0 0.0
    %140 = vmatprep.subr.mxu0 0.0
    %141 = vmatpush1.msra.mxu0 0.0
    %142 = vmatprep.subr.mxu0 0.0
    %143 = vmatpush1.msra.mxu0 0.0
    %144 = vmatprep.subr.mxu0 0.0
    %145 = vmatpush1.msra.mxu0 0.0
    %146 = vmatprep.subr.mxu0 0.0
    %147 = vmatpush1.msra.mxu0 0.0
    %148 = vmatprep.subr.mxu0 0.0
    %149 = vmatpush1.msra.mxu0 0.0
    %150 = vmatprep.subr.mxu0 0.0
    %151 = vmatpush1.msra.mxu0 0.0
    %152 = vmatprep.subr.mxu0 0.0
    %153 = vmatpush1.msra.mxu0 0.0
    %154 = vmatprep.mubr.f32.mxu0 0.0
    %155 = vmatmul.mubr.f32.gmra.mrb[0].mxu0 %v67
    %v156 = vpop.f32.mrb[0].mxu0
    %v157 = vadd.f32 %v58, %v156
    %v158 = vpop.f32.mrb[0].mxu0
    %v159 = vadd.f32 %v62, %v158
    %160 = vmatprep.mubr.f32.mxu0 0.0
    %161 = vmatmul.mubr.f32.gmra.mrb[0].mxu0 %v70
    %v162 = vpop.f32.mrb[0].mxu0
    %v163 = vadd.f32 %v58, %v162
    %v164 = vpop.f32.mrb[0].mxu0
    %v165 = vadd.f32 %v62, %v164
    %166 = vmatprep.mubr.f32.mxu0 0.0
    %167 = vmatmul.mubr.f32.gmra.mrb[0].mxu0 %v73
    %v168 = vpop.f32.mrb[0].mxu0
    %v169 = vadd.f32 %v58, %v168
    %v170 = vpop.f32.mrb[0].mxu0
    %v171 = vadd.f32 %v62, %v170
    %172 = vmatprep.mubr.f32.mxu0 0.0
    %173 = vmatmul.mubr.f32.gmra.mrb[0].mxu0 %v76
    %v174 = vpop.f32.mrb[0].mxu0
    %v175 = vadd.f32 %v58, %v174
    %v176 = vpop.f32.mrb[0].mxu0
    %v177 = vadd.f32 %v62, %v176
    %178 = vmatprep.mubr.f32.mxu0 0.0
    %179 = vmatmul.mubr.f32.gmra.mrb[0].mxu0 %v79
    %v180 = vpop.f32.mrb[0].mxu0
    %v181 = vadd.f32 %v58, %v180
    %v182 = vpop.f32.mrb[0].mxu0
    %v183 = vadd.f32 %v62, %v182
    %184 = vmatprep.mubr.f32.mxu0 0.0
    %185 = vmatmul.mubr.f32.gmra.mrb[0].mxu0 %v82
    %v186 = vpop.f32.mrb[0].mxu0
    %v187 = vadd.f32 %v58, %v186
    %v188 = vpop.f32.mrb[0].mxu0
    %v189 = vadd.f32 %v62, %v188
    %190 = vmatprep.mubr.f32.mxu0 0.0
    %191 = vmatmul.mubr.f32.gmra.mrb[0].mxu0 %v85
    %v192 = vpop.f32.mrb[0].mxu0
    %v193 = vadd.f32 %v58, %v192
    %v194 = vpop.f32.mrb[0].mxu0
    %v195 = vadd.f32 %v62, %v194
    %196 = vmatprep.mubr.f32.mxu0 0.0
    %197 = vmatmul.mubr.f32.gmra.mrb[0].mxu0 %v88
    %v198 = vpop.f32.mrb[0].mxu0
    %v199 = vadd.f32 %v58, %v198
    %v200 = vpop.f32.mrb[0].mxu0
    %v201 = vadd.f32 %v62, %v200
    %202 = vdwg.mxu0
    %203 = vst [vmem:[#allocation2] sm:$0xff] %v157
    %204 = vst [vmem:[#allocation2 + $0x8] sm:$0xff] %v159
    %205 = vst [vmem:[#allocation2 + $0x10] sm:$0xff] %v163
    %206 = vst [vmem:[#allocation2 + $0x18] sm:$0xff] %v165
    %207 = vst [vmem:[#allocation2 + $0x20] sm:$0xff] %v169
    %208 = vst [vmem:[#allocation2 + $0x28] sm:$0xff] %v171
    %209 = vst [vmem:[#allocation2 + $0x30] sm:$0xff] %v175
    %210 = vst [vmem:[#allocation2 + $0x38] sm:$0xff] %v177
    %211 = vst [vmem:[#allocation2 + $0x40] sm:$0xff] %v181
    %212 = vst [vmem:[#allocation2 + $0x48] sm:$0xff] %v183
    %213 = vst [vmem:[#allocation2 + $0x50] sm:$0xff] %v187
    %214 = vst [vmem:[#allocation2 + $0x58] sm:$0xff] %v189
    %215 = vst [vmem:[#allocation2 + $0x60] sm:$0xff] %v193
    %216 = vst [vmem:[#allocation2 + $0x68] sm:$0xff] %v195
    %217 = vst [vmem:[#allocation2 + $0x70] sm:$0xff] %v199
    %218 = vst [vmem:[#allocation2 + $0x78] sm:$0xff] %v201
    %v219 = vld [vmem:[#allocation2] sm:$0xff]
    %v220 = vld [vmem:[#allocation2 + $0x8] sm:$0xff]
    %v221 = vxor.u32 %v219, 2147483648
    %v222 = vxor.u32 %v220, 2147483648
    %v223 = vmul.f32 %v221, 1.442695
    %v224 = vpow.pop %v223
    %v225 = vmul.f32 %v222, 1.442695
    %v226 = vpow.pop %v225
    %v227 = vadd.f32 %v224, 1.0
    %v228 = vadd.f32 %v226, 1.0
    %v229 = vrcp.pop %v227
    %v230 = vmul.f32 1.0, %v229
    %v231 = vrcp.pop %v228
    %v232 = vmul.f32 1.0, %v231
    %v233 = vtanh.pop %v220
    %235 = vrot.lane.b32.xlu0 %v233, 64
    %v236 = vpop.permute.xlu0 %235
    %v238 = vmul.f32 %v230, %v236
    %v239 = vtanh.pop %v238
    %v240 = vmul.f32 %v232, %v239
    %v241 = vld [vmem:[%s4] sm:$0xff]
    %v242 = vld [vmem:[%s4 + $0x8] sm:$0xff]
    %v243 = vld [vmem:[%s4 + $0x10] sm:$0xff]
    %v244 = vld [vmem:[%s4 + $0x18] sm:$0xff]
    %v245 = vld [vmem:[%s4 + $0x20] sm:$0xff]
    %v246 = vld [vmem:[%s4 + $0x28] sm:$0xff]
    %v247 = vld [vmem:[%s4 + $0x30] sm:$0xff]
    %v248 = vld [vmem:[%s4 + $0x38] sm:$0xff]
    %v249 = vld [vmem:[%s4 + $0x40] sm:$0xff]
    %v250 = vld [vmem:[%s4 + $0x48] sm:$0xff]
    %v251 = vld [vmem:[%s4 + $0x50] sm:$0xff]
    %v252 = vld [vmem:[%s4 + $0x58] sm:$0xff]
    %v253 = vld [vmem:[%s4 + $0x60] sm:$0xff]
    %v254 = vld [vmem:[%s4 + $0x68] sm:$0xff]
    %v255 = vld [vmem:[%s4 + $0x70] sm:$0xff]
    %v256 = vld [vmem:[%s4 + $0x78] sm:$0xff]
    %v257 = vld [vmem:[%s5] sm:$0x3]
    %v259 = vlaneseq
    %v260 = vshrl.u32 %v259, 7
    %v261 = vsub.s32 0, %v260
    %v262 = vrot.slane %v257, %v261
    %v263 = vlaneseq
    %v264 = vshrl.u32 %v263, 7
    %v265 = vsub.s32 1, %v264
    %v266 = vrot.slane %v257, %v265
    %vm269 = vcmask 523264
    %v271 = vsel %vm269, %v240, 0
    %273 = vmatprep.subr.mxu0 %v242
    %274 = vmatpush1.msra.mxu0 %v241
    %275 = vmatprep.subr.mxu0 %v244
    %276 = vmatpush1.msra.mxu0 %v243
    %277 = vmatprep.subr.mxu0 %v246
    %278 = vmatpush1.msra.mxu0 %v245
    %279 = vmatprep.subr.mxu0 %v248
    %280 = vmatpush1.msra.mxu0 %v247
    %281 = vmatprep.subr.mxu0 %v250
    %282 = vmatpush1.msra.mxu0 %v249
    %283 = vmatprep.subr.mxu0 %v252
    %284 = vmatpush1.msra.mxu0 %v251
    %285 = vmatprep.subr.mxu0 %v254
    %286 = vmatpush1.msra.mxu0 %v253
    %287 = vmatprep.subr.mxu0 %v256
    %288 = vmatpush1.msra.mxu0 %v255
    %289 = vmatprep.subr.mxu0 0.0
    %290 = vmatpush1.msra.mxu0 0.0
    %291 = vmatprep.subr.mxu0 0.0
    %292 = vmatpush1.msra.mxu0 0.0
    %293 = vmatprep.subr.mxu0 0.0
    %294 = vmatpush1.msra.mxu0 0.0
    %295 = vmatprep.subr.mxu0 0.0
    %296 = vmatpush1.msra.mxu0 0.0
    %297 = vmatprep.subr.mxu0 0.0
    %298 = vmatpush1.msra.mxu0 0.0
    %299 = vmatprep.subr.mxu0 0.0
    %300 = vmatpush1.msra.mxu0 0.0
    %301 = vmatprep.subr.mxu0 0.0
    %302 = vmatpush1.msra.mxu0 0.0
    %303 = vmatprep.subr.mxu0 0.0
    %304 = vmatpush1.msra.mxu0 0.0
    %305 = vmatprep.subr.mxu0 0.0
    %306 = vmatpush1.msra.mxu0 0.0
    %307 = vmatprep.subr.mxu0 0.0
    %308 = vmatpush1.msra.mxu0 0.0
    %309 = vmatprep.subr.mxu0 0.0
    %310 = vmatpush1.msra.mxu0 0.0
    %311 = vmatprep.subr.mxu0 0.0
    %312 = vmatpush1.msra.mxu0 0.0
    %313 = vmatprep.subr.mxu0 0.0
    %314 = vmatpush1.msra.mxu0 0.0
    %315 = vmatprep.subr.mxu0 0.0
    %316 = vmatpush1.msra.mxu0 0.0
    %317 = vmatprep.subr.mxu0 0.0
    %318 = vmatpush1.msra.mxu0 0.0
    %319 = vmatprep.subr.mxu0 0.0
    %320 = vmatpush1.msra.mxu0 0.0
    %321 = vmatprep.subr.mxu0 0.0
    %322 = vmatpush1.msra.mxu0 0.0
    %323 = vmatprep.subr.mxu0 0.0
    %324 = vmatpush1.msra.mxu0 0.0
    %325 = vmatprep.subr.mxu0 0.0
    %326 = vmatpush1.msra.mxu0 0.0
    %327 = vmatprep.subr.mxu0 0.0
    %328 = vmatpush1.msra.mxu0 0.0
    %329 = vmatprep.subr.mxu0 0.0
    %330 = vmatpush1.msra.mxu0 0.0
    %331 = vmatprep.subr.mxu0 0.0
    %332 = vmatpush1.msra.mxu0 0.0
    %333 = vmatprep.subr.mxu0 0.0
    %334 = vmatpush1.msra.mxu0 0.0
    %335 = vmatprep.subr.mxu0 0.0
    %336 = vmatpush1.msra.mxu0 0.0
    %337 = vmatprep.mubr.f32.mxu0 0.0
    %338 = vmatmul.mubr.f32.gmra.mrb[0].mxu0 %v271
    %v339 = vpop.f32.mrb[0].mxu0
    %v340 = vadd.f32 %v262, %v339
    %v341 = vpop.f32.mrb[0].mxu0
    %v342 = vadd.f32 %v266, %v341
    %343 = vdwg.mxu0
    %v344 = vxor.u32 %v340, 2147483648
    %v345 = vxor.u32 %v342, 2147483648
    %v346 = vmul.f32 %v344, 1.442695
    %v347 = vpow.pop %v346
    %v348 = vmul.f32 %v345, 1.442695
    %v349 = vpow.pop %v348
    %v350 = vadd.f32 %v347, 1.0
    %v351 = vadd.f32 %v349, 1.0
    %v352 = vrcp.pop %v350
    %v353 = vmul.f32 1.0, %v352
    %v354 = vrcp.pop %v351
    %v355 = vmul.f32 1.0, %v354
    %v356 = vtanh.pop %v342
    %358 = vrot.lane.b32.xlu0 %v356, 64
    %v359 = vpop.permute.xlu0 %358
    %v361 = vmul.f32 %v353, %v359
    %v362 = vtanh.pop %v361
    %v363 = vmul.f32 %v355, %v362
    %v364 = vld [vmem:[#allocation2 + $0x10] sm:$0xff]
    %v365 = vld [vmem:[#allocation2 + $0x18] sm:$0xff]
    %v366 = vld [vmem:[#allocation3] sm:$0xff]
    %v367 = vld [vmem:[#allocation3 + $0x8] sm:$0xff]
    %v368 = vld [vmem:[#allocation3 + $0x10] sm:$0xff]
    %v369 = vld [vmem:[#allocation3 + $0x18] sm:$0xff]
    %v370 = vld [vmem:[#allocation3 + $0x20] sm:$0xff]
    %v371 = vld [vmem:[#allocation3 + $0x28] sm:$0xff]
    %v372 = vld [vmem:[#allocation3 + $0x30] sm:$0xff]
    %v373 = vld [vmem:[#allocation3 + $0x38] sm:$0xff]
    %v374 = vld [vmem:[#allocation3 + $0x40] sm:$0xff]
    %v375 = vld [vmem:[#allocation3 + $0x48] sm:$0xff]
    %v376 = vld [vmem:[#allocation3 + $0x50] sm:$0xff]
    %v377 = vld [vmem:[#allocation3 + $0x58] sm:$0xff]
    %v378 = vld [vmem:[#allocation3 + $0x60] sm:$0xff]
    %v379 = vld [vmem:[#allocation3 + $0x68] sm:$0xff]
    %v380 = vld [vmem:[#allocation3 + $0x70] sm:$0xff]
    %v381 = vld [vmem:[#allocation3 + $0x78] sm:$0xff]
    %382 = vmatprep.subr.mxu0 %v367
    %383 = vmatpush1.msra.mxu0 %v366
    %384 = vmatprep.subr.mxu0 %v369
    %385 = vmatpush1.msra.mxu0 %v368
    %386 = vmatprep.subr.mxu0 %v371
    %387 = vmatpush1.msra.mxu0 %v370
    %388 = vmatprep.subr.mxu0 %v373
    %389 = vmatpush1.msra.mxu0 %v372
    %390 = vmatprep.subr.mxu0 %v375
    %391 = vmatpush1.msra.mxu0 %v374
    %392 = vmatprep.subr.mxu0 %v377
    %393 = vmatpush1.msra.mxu0 %v376
    %394 = vmatprep.subr.mxu0 %v379
    %395 = vmatpush1.msra.mxu0 %v378
    %396 = vmatprep.subr.mxu0 %v381
    %397 = vmatpush1.msra.mxu0 %v380
    %398 = vmatprep.subr.mxu0 0.0
    %399 = vmatpush1.msra.mxu0 0.0
    %400 = vmatprep.subr.mxu0 0.0
    %401 = vmatpush1.msra.mxu0 0.0
    %402 = vmatprep.subr.mxu0 0.0
    %403 = vmatpush1.msra.mxu0 0.0
    %404 = vmatprep.subr.mxu0 0.0
    %405 = vmatpush1.msra.mxu0 0.0
    %406 = vmatprep.subr.mxu0 0.0
    %407 = vmatpush1.msra.mxu0 0.0
    %408 = vmatprep.subr.mxu0 0.0
    %409 = vmatpush1.msra.mxu0 0.0
    %410 = vmatprep.subr.mxu0 0.0
    %411 = vmatpush1.msra.mxu0 0.0
    %412 = vmatprep.subr.mxu0 0.0
    %413 = vmatpush1.msra.mxu0 0.0
    %414 = vmatprep.subr.mxu0 0.0
    %415 = vmatpush1.msra.mxu0 0.0
    %416 = vmatprep.subr.mxu0 0.0
    %417 = vmatpush1.msra.mxu0 0.0
    %418 = vmatprep.subr.mxu0 0.0
    %419 = vmatpush1.msra.mxu0 0.0
    %420 = vmatprep.subr.mxu0 0.0
    %421 = vmatpush1.msra.mxu0 0.0
    %422 = vmatprep.subr.mxu0 0.0
    %423 = vmatpush1.msra.mxu0 0.0
    %424 = vmatprep.subr.mxu0 0.0
    %425 = vmatpush1.msra.mxu0 0.0
    %426 = vmatprep.subr.mxu0 0.0
    %427 = vmatpush1.msra.mxu0 0.0
    %428 = vmatprep.subr.mxu0 0.0
    %429 = vmatpush1.msra.mxu0 0.0
    %430 = vmatprep.subr.mxu0 0.0
    %431 = vmatpush1.msra.mxu0 0.0
    %432 = vmatprep.subr.mxu0 0.0
    %433 = vmatpush1.msra.mxu0 0.0
    %434 = vmatprep.subr.mxu0 0.0
    %435 = vmatpush1.msra.mxu0 0.0
    %436 = vmatprep.subr.mxu0 0.0
    %437 = vmatpush1.msra.mxu0 0.0
    %438 = vmatprep.subr.mxu0 0.0
    %439 = vmatpush1.msra.mxu0 0.0
    %440 = vmatprep.subr.mxu0 0.0
    %441 = vmatpush1.msra.mxu0 0.0
    %442 = vmatprep.subr.mxu0 0.0
    %443 = vmatpush1.msra.mxu0 0.0
    %444 = vmatprep.subr.mxu0 0.0
    %445 = vmatpush1.msra.mxu0 0.0
    %446 = vmatprep.mubr.f32.mxu0 0.0
    %447 = vmatmul.mubr.f32.gmra.mrb[0].mxu0 %v271
    %v448 = vpop.f32.mrb[0].mxu0
    %v449 = vadd.f32 0.0, %v448
    %v450 = vpop.f32.mrb[0].mxu0
    %v451 = vadd.f32 0.0, %v450
    %452 = vdwg.mxu0
    %v453 = vadd.f32 %v364, %v449
    %v454 = vadd.f32 %v365, %v451
    %v455 = vxor.u32 %v453, 2147483648
    %v456 = vxor.u32 %v454, 2147483648
    %v457 = vmul.f32 %v455, 1.442695
    %v458 = vpow.pop %v457
    %v459 = vmul.f32 %v456, 1.442695
    %v460 = vpow.pop %v459
    %v461 = vadd.f32 %v458, 1.0
    %v462 = vadd.f32 %v460, 1.0
    %v463 = vrcp.pop %v461
    %v464 = vmul.f32 1.0, %v463
    %v465 = vrcp.pop %v462
    %v466 = vmul.f32 1.0, %v465
    %v467 = vtanh.pop %v454
    %469 = vrot.lane.b32.xlu0 %v238, 64
    %v470 = vpop.permute.xlu0 %469
    %v472 = vmul.f32 %v464, %v470
    %474 = vrot.lane.b32.xlu0 %v467, 64
    %v475 = vpop.permute.xlu0 %474
    %v477 = vmul.f32 %v464, %v475
    %479 = vrot.lane.b32.xlu0 %v477, 64
    %v480 = vpop.permute.xlu0 %479
    %v482 = vadd.f32 %v472, %v480
    %v483 = vtanh.pop %v482
    %485 = vrot.lane.b32.xlu0 %v483, 64
    %v486 = vpop.permute.xlu0 %485
    %v488 = vmul.f32 %v466, %v486
    %490 = vrot.lane.b32.xlu0 %v363, 64
    %v491 = vpop.permute.xlu0 %490
    %v493 = vsel %vm269, %v488, %v491
    %v494 = vld [vmem:[%s4] sm:$0xff]
    %v495 = vld [vmem:[%s4 + $0x8] sm:$0xff]
    %v496 = vld [vmem:[%s4 + $0x10] sm:$0xff]
    %v497 = vld [vmem:[%s4 + $0x18] sm:$0xff]
    %v498 = vld [vmem:[%s4 + $0x20] sm:$0xff]
    %v499 = vld [vmem:[%s4 + $0x28] sm:$0xff]
    %v500 = vld [vmem:[%s4 + $0x30] sm:$0xff]
    %v501 = vld [vmem:[%s4 + $0x38] sm:$0xff]
    %v502 = vld [vmem:[%s4 + $0x40] sm:$0xff]
    %v503 = vld [vmem:[%s4 + $0x48] sm:$0xff]
    %v504 = vld [vmem:[%s4 + $0x50] sm:$0xff]
    %v505 = vld [vmem:[%s4 + $0x58] sm:$0xff]
    %v506 = vld [vmem:[%s4 + $0x60] sm:$0xff]
    %v507 = vld [vmem:[%s4 + $0x68] sm:$0xff]
    %v508 = vld [vmem:[%s4 + $0x70] sm:$0xff]
    %v509 = vld [vmem:[%s4 + $0x78] sm:$0xff]
    %v510 = vld [vmem:[%s4 + $0x80] sm:$0xff]
    %v511 = vld [vmem:[%s4 + $0x88] sm:$0xff]
    %v512 = vld [vmem:[%s4 + $0x90] sm:$0xff]
    %v513 = vld [vmem:[%s4 + $0x98] sm:$0xff]
    %v514 = vld [vmem:[%s4 + $0xa0] sm:$0xff]
    %v515 = vld [vmem:[%s4 + $0xa8] sm:$0xff]
    %v516 = vld [vmem:[%s4 + $0xb0] sm:$0xff]
    %v517 = vld [vmem:[%s4 + $0xb8] sm:$0xff]
    %v518 = vld [vmem:[%s4 + $0xc0] sm:$0xff]
    %v519 = vld [vmem:[%s4 + $0xc8] sm:$0xff]
    %v520 = vld [vmem:[%s4 + $0xd0] sm:$0xff]
    %v521 = vld [vmem:[%s4 + $0xd8] sm:$0xff]
    %v522 = vld [vmem:[%s4 + $0xe0] sm:$0xff]
    %v523 = vld [vmem:[%s4 + $0xe8] sm:$0xff]
    %v524 = vld [vmem:[%s4 + $0xf0] sm:$0xff]
    %v525 = vld [vmem:[%s4 + $0xf8] sm:$0xff]
    %526 = vmatprep.subr.mxu0 %v495
    %527 = vmatpush1.msra.mxu0 %v494
    %528 = vmatprep.subr.mxu0 %v497
    %529 = vmatpush1.msra.mxu0 %v496
    %530 = vmatprep.subr.mxu0 %v499
    %531 = vmatpush1.msra.mxu0 %v498
    %532 = vmatprep.subr.mxu0 %v501
    %533 = vmatpush1.msra.mxu0 %v500
    %534 = vmatprep.subr.mxu0 %v503
    %535 = vmatpush1.msra.mxu0 %v502
    %536 = vmatprep.subr.mxu0 %v505
    %537 = vmatpush1.msra.mxu0 %v504
    %538 = vmatprep.subr.mxu0 %v507
    %539 = vmatpush1.msra.mxu0 %v506
    %540 = vmatprep.subr.mxu0 %v509
    %541 = vmatpush1.msra.mxu0 %v508
    %542 = vmatprep.subr.mxu0 %v511
    %543 = vmatpush1.msra.mxu0 %v510
    %544 = vmatprep.subr.mxu0 %v513
    %545 = vmatpush1.msra.mxu0 %v512
    %546 = vmatprep.subr.mxu0 %v515
    %547 = vmatpush1.msra.mxu0 %v514
    %548 = vmatprep.subr.mxu0 %v517
    %549 = vmatpush1.msra.mxu0 %v516
    %550 = vmatprep.subr.mxu0 %v519
    %551 = vmatpush1.msra.mxu0 %v518
    %552 = vmatprep.subr.mxu0 %v521
    %553 = vmatpush1.msra.mxu0 %v520
    %554 = vmatprep.subr.mxu0 %v523
    %555 = vmatpush1.msra.mxu0 %v522
    %556 = vmatprep.subr.mxu0 %v525
    %557 = vmatpush1.msra.mxu0 %v524
    %558 = vmatprep.subr.mxu0 0.0
    %559 = vmatpush1.msra.mxu0 0.0
    %560 = vmatprep.subr.mxu0 0.0
    %561 = vmatpush1.msra.mxu0 0.0
    %562 = vmatprep.subr.mxu0 0.0
    %563 = vmatpush1.msra.mxu0 0.0
    %564 = vmatprep.subr.mxu0 0.0
    %565 = vmatpush1.msra.mxu0 0.0
    %566 = vmatprep.subr.mxu0 0.0
    %567 = vmatpush1.msra.mxu0 0.0
    %568 = vmatprep.subr.mxu0 0.0
    %569 = vmatpush1.msra.mxu0 0.0
    %570 = vmatprep.subr.mxu0 0.0
    %571 = vmatpush1.msra.mxu0 0.0
    %572 = vmatprep.subr.mxu0 0.0
    %573 = vmatpush1.msra.mxu0 0.0
    %574 = vmatprep.subr.mxu0 0.0
    %575 = vmatpush1.msra.mxu0 0.0
    %576 = vmatprep.subr.mxu0 0.0
    %577 = vmatpush1.msra.mxu0 0.0
    %578 = vmatprep.subr.mxu0 0.0
    %579 = vmatpush1.msra.mxu0 0.0
    %580 = vmatprep.subr.mxu0 0.0
    %581 = vmatpush1.msra.mxu0 0.0
    %582 = vmatprep.subr.mxu0 0.0
    %583 = vmatpush1.msra.mxu0 0.0
    %584 = vmatprep.subr.mxu0 0.0
    %585 = vmatpush1.msra.mxu0 0.0
    %586 = vmatprep.subr.mxu0 0.0
    %587 = vmatpush1.msra.mxu0 0.0
    %588 = vmatprep.subr.mxu0 0.0
    %589 = vmatpush1.msra.mxu0 0.0
    %590 = vmatprep.mubr.f32.mxu0 0.0
    %591 = vmatmul.mubr.f32.gmra.mrb[0].mxu0 %v493
    %v592 = vpop.f32.mrb[0].mxu0
    %v593 = vadd.f32 %v262, %v592
    %v594 = vpop.f32.mrb[0].mxu0
    %v595 = vadd.f32 %v266, %v594
    %596 = vdwg.mxu0
    %v597 = vxor.u32 %v593, 2147483648
    %v598 = vxor.u32 %v595, 2147483648
    %v599 = vmul.f32 %v597, 1.442695
    %v600 = vpow.pop %v599
    %v601 = vmul.f32 %v598, 1.442695
    %v602 = vpow.pop %v601
    %v603 = vadd.f32 %v600, 1.0
    %v604 = vadd.f32 %v602, 1.0
    %v605 = vrcp.pop %v603
    %v606 = vmul.f32 1.0, %v605
    %v607 = vrcp.pop %v604
    %v608 = vmul.f32 1.0, %v607
    %v609 = vtanh.pop %v595
    %611 = vrot.lane.b32.xlu0 %v361, 64
    %v612 = vpop.permute.xlu0 %611
    %v614 = vmul.f32 %v606, %v612
    %616 = vrot.lane.b32.xlu0 %v609, 64
    %v617 = vpop.permute.xlu0 %616
    %v619 = vmul.f32 %v606, %v617
    %621 = vrot.lane.b32.xlu0 %v619, 64
    %v622 = vpop.permute.xlu0 %621
    %v624 = vadd.f32 %v614, %v622
    %v625 = vtanh.pop %v624
    %627 = vrot.lane.b32.xlu0 %v625, 64
    %v628 = vpop.permute.xlu0 %627
    %v630 = vmul.f32 %v608, %v628
    %v631 = vld [vmem:[#allocation2 + $0x20] sm:$0xff]
    %v632 = vld [vmem:[#allocation2 + $0x28] sm:$0xff]
    %v634 = vsel %vm269, %v488, 0
    %636 = vmatprep.subr.mxu0 %v367
    %637 = vmatpush1.msra.mxu0 %v366
    %638 = vmatprep.subr.mxu0 %v369
    %639 = vmatpush1.msra.mxu0 %v368
    %640 = vmatprep.subr.mxu0 %v371
    %641 = vmatpush1.msra.mxu0 %v370
    %642 = vmatprep.subr.mxu0 %v373
    %643 = vmatpush1.msra.mxu0 %v372
    %644 = vmatprep.subr.mxu0 %v375
    %645 = vmatpush1.msra.mxu0 %v374
    %646 = vmatprep.subr.mxu0 %v377
    %647 = vmatpush1.msra.mxu0 %v376
    %648 = vmatprep.subr.mxu0 %v379
    %649 = vmatpush1.msra.mxu0 %v378
    %650 = vmatprep.subr.mxu0 %v381
    %651 = vmatpush1.msra.mxu0 %v380
    %652 = vmatprep.subr.mxu0 0.0
    %653 = vmatpush1.msra.mxu0 0.0
    %654 = vmatprep.subr.mxu0 0.0
    %655 = vmatpush1.msra.mxu0 0.0
    %656 = vmatprep.subr.mxu0 0.0
    %657 = vmatpush1.msra.mxu0 0.0
    %658 = vmatprep.subr.mxu0 0.0
    %659 = vmatpush1.msra.mxu0 0.0
    %660 = vmatprep.subr.mxu0 0.0
    %661 = vmatpush1.msra.mxu0 0.0
    %662 = vmatprep.subr.mxu0 0.0
    %663 = vmatpush1.msra.mxu0 0.0
    %664 = vmatprep.subr.mxu0 0.0
    %665 = vmatpush1.msra.mxu0 0.0
    %666 = vmatprep.subr.mxu0 0.0
    %667 = vmatpush1.msra.mxu0 0.0
    %668 = vmatprep.subr.mxu0 0.0
    %669 = vmatpush1.msra.mxu0 0.0
    %670 = vmatprep.subr.mxu0 0.0
    %671 = vmatpush1.msra.mxu0 0.0
    %672 = vmatprep.subr.mxu0 0.0
    %673 = vmatpush1.msra.mxu0 0.0
    %674 = vmatprep.subr.mxu0 0.0
    %675 = vmatpush1.msra.mxu0 0.0
    %676 = vmatprep.subr.mxu0 0.0
    %677 = vmatpush1.msra.mxu0 0.0
    %678 = vmatprep.subr.mxu0 0.0
    %679 = vmatpush1.msra.mxu0 0.0
    %680 = vmatprep.subr.mxu0 0.0
    %681 = vmatpush1.msra.mxu0 0.0
    %682 = vmatprep.subr.mxu0 0.0
    %683 = vmatpush1.msra.mxu0 0.0
    %684 = vmatprep.subr.mxu0 0.0
    %685 = vmatpush1.msra.mxu0 0.0
    %686 = vmatprep.subr.mxu0 0.0
    %687 = vmatpush1.msra.mxu0 0.0
    %688 = vmatprep.subr.mxu0 0.0
    %689 = vmatpush1.msra.mxu0 0.0
    %690 = vmatprep.subr.mxu0 0.0
    %691 = vmatpush1.msra.mxu0 0.0
    %692 = vmatprep.subr.mxu0 0.0
    %693 = vmatpush1.msra.mxu0 0.0
    %694 = vmatprep.subr.mxu0 0.0
    %695 = vmatpush1.msra.mxu0 0.0
    %696 = vmatprep.subr.mxu0 0.0
    %697 = vmatpush1.msra.mxu0 0.0
    %698 = vmatprep.subr.mxu0 0.0
    %699 = vmatpush1.msra.mxu0 0.0
    %700 = vmatprep.mubr.f32.mxu0 0.0
    %701 = vmatmul.mubr.f32.gmra.mrb[0].mxu0 %v634
    %v702 = vpop.f32.mrb[0].mxu0
    %v703 = vadd.f32 0.0, %v702
    %v704 = vpop.f32.mrb[0].mxu0
    %v705 = vadd.f32 0.0, %v704
    %706 = vdwg.mxu0
    %v707 = vadd.f32 %v631, %v703
    %v708 = vadd.f32 %v632, %v705
    %v709 = vxor.u32 %v707, 2147483648
    %v710 = vxor.u32 %v708, 2147483648
    %v711 = vmul.f32 %v709, 1.442695
    %v712 = vpow.pop %v711
    %v713 = vmul.f32 %v710, 1.442695
    %v714 = vpow.pop %v713
    %v715 = vadd.f32 %v712, 1.0
    %v716 = vadd.f32 %v714, 1.0
    %v717 = vrcp.pop %v715
    %v718 = vmul.f32 1.0, %v717
    %v719 = vrcp.pop %v716
    %v720 = vmul.f32 1.0, %v719
    %v721 = vtanh.pop %v708
    %v722 = vmul.f32 %v718, %v482
    %724 = vrot.lane.b32.xlu0 %v721, 64
    %v725 = vpop.permute.xlu0 %724
    %v727 = vmul.f32 %v718, %v725
    %729 = vrot.lane.b32.xlu0 %v727, 64
    %v730 = vpop.permute.xlu0 %729
    %v732 = vadd.f32 %v722, %v730
    %v733 = vtanh.pop %v732
    %735 = vrot.lane.b32.xlu0 %v733, 64
    %v736 = vpop.permute.xlu0 %735
    %v738 = vmul.f32 %v720, %v736
    %740 = vrot.lane.b32.xlu0 %v630, 64
    %v741 = vpop.permute.xlu0 %740
    %v743 = vsel %vm269, %v738, %v741
    %744 = vmatprep.subr.mxu0 %v495
    %745 = vmatpush1.msra.mxu0 %v494
    %746 = vmatprep.subr.mxu0 %v497
    %747 = vmatpush1.msra.mxu0 %v496
    %748 = vmatprep.subr.mxu0 %v499
    %749 = vmatpush1.msra.mxu0 %v498
    %750 = vmatprep.subr.mxu0 %v501
    %751 = vmatpush1.msra.mxu0 %v500
    %752 = vmatprep.subr.mxu0 %v503
    %753 = vmatpush1.msra.mxu0 %v502
    %754 = vmatprep.subr.mxu0 %v505
    %755 = vmatpush1.msra.mxu0 %v504
    %756 = vmatprep.subr.mxu0 %v507
    %757 = vmatpush1.msra.mxu0 %v506
    %758 = vmatprep.subr.mxu0 %v509
    %759 = vmatpush1.msra.mxu0 %v508
    %760 = vmatprep.subr.mxu0 %v511
    %761 = vmatpush1.msra.mxu0 %v510
    %762 = vmatprep.subr.mxu0 %v513
    %763 = vmatpush1.msra.mxu0 %v512
    %764 = vmatprep.subr.mxu0 %v515
    %765 = vmatpush1.msra.mxu0 %v514
    %766 = vmatprep.subr.mxu0 %v517
    %767 = vmatpush1.msra.mxu0 %v516
    %768 = vmatprep.subr.mxu0 %v519
    %769 = vmatpush1.msra.mxu0 %v518
    %770 = vmatprep.subr.mxu0 %v521
    %771 = vmatpush1.msra.mxu0 %v520
    %772 = vmatprep.subr.mxu0 %v523
    %773 = vmatpush1.msra.mxu0 %v522
    %774 = vmatprep.subr.mxu0 %v525
    %775 = vmatpush1.msra.mxu0 %v524
    %776 = vmatprep.subr.mxu0 0.0
    %777 = vmatpush1.msra.mxu0 0.0
    %778 = vmatprep.subr.mxu0 0.0
    %779 = vmatpush1.msra.mxu0 0.0
    %780 = vmatprep.subr.mxu0 0.0
    %781 = vmatpush1.msra.mxu0 0.0
    %782 = vmatprep.subr.mxu0 0.0
    %783 = vmatpush1.msra.mxu0 0.0
    %784 = vmatprep.subr.mxu0 0.0
    %785 = vmatpush1.msra.mxu0 0.0
    %786 = vmatprep.subr.mxu0 0.0
    %787 = vmatpush1.msra.mxu0 0.0
    %788 = vmatprep.subr.mxu0 0.0
    %789 = vmatpush1.msra.mxu0 0.0
    %790 = vmatprep.subr.mxu0 0.0
    %791 = vmatpush1.msra.mxu0 0.0
    %792 = vmatprep.subr.mxu0 0.0
    %793 = vmatpush1.msra.mxu0 0.0
    %794 = vmatprep.subr.mxu0 0.0
    %795 = vmatpush1.msra.mxu0 0.0
    %796 = vmatprep.subr.mxu0 0.0
    %797 = vmatpush1.msra.mxu0 0.0
    %798 = vmatprep.subr.mxu0 0.0
    %799 = vmatpush1.msra.mxu0 0.0
    %800 = vmatprep.subr.mxu0 0.0
    %801 = vmatpush1.msra.mxu0 0.0
    %802 = vmatprep.subr.mxu0 0.0
    %803 = vmatpush1.msra.mxu0 0.0
    %804 = vmatprep.subr.mxu0 0.0
    %805 = vmatpush1.msra.mxu0 0.0
    %806 = vmatprep.subr.mxu0 0.0
    %807 = vmatpush1.msra.mxu0 0.0
    %808 = vmatprep.mubr.f32.mxu0 0.0
    %809 = vmatmul.mubr.f32.gmra.mrb[0].mxu0 %v743
    %v810 = vpop.f32.mrb[0].mxu0
    %v811 = vadd.f32 %v262, %v810
    %v812 = vpop.f32.mrb[0].mxu0
    %v813 = vadd.f32 %v266, %v812
    %814 = vdwg.mxu0
    %v815 = vxor.u32 %v811, 2147483648
    %v816 = vxor.u32 %v813, 2147483648
    %v817 = vmul.f32 %v815, 1.442695
    %v818 = vpow.pop %v817
    %v819 = vmul.f32 %v816, 1.442695
    %v820 = vpow.pop %v819
    %v821 = vadd.f32 %v818, 1.0
    %v822 = vadd.f32 %v820, 1.0
    %v823 = vrcp.pop %v821
    %v824 = vmul.f32 1.0, %v823
    %v825 = vrcp.pop %v822
    %v826 = vmul.f32 1.0, %v825
    %v827 = vtanh.pop %v813
    %v828 = vmul.f32 %v824, %v624
    %830 = vrot.lane.b32.xlu0 %v827, 64
    %v831 = vpop.permute.xlu0 %830
    %v833 = vmul.f32 %v824, %v831
    %835 = vrot.lane.b32.xlu0 %v833, 64
    %v836 = vpop.permute.xlu0 %835
    %v838 = vadd.f32 %v828, %v836
    %v839 = vtanh.pop %v838
    %841 = vrot.lane.b32.xlu0 %v839, 64
    %v842 = vpop.permute.xlu0 %841
    %v844 = vmul.f32 %v826, %v842
    %v845 = vld [vmem:[#allocation2 + $0x30] sm:$0xff]
    %v846 = vld [vmem:[#allocation2 + $0x38] sm:$0xff]
    %v848 = vsel %vm269, %v738, 0
    %850 = vmatprep.subr.mxu0 %v367
    %851 = vmatpush1.msra.mxu0 %v366
    %852 = vmatprep.subr.mxu0 %v369
    %853 = vmatpush1.msra.mxu0 %v368
    %854 = vmatprep.subr.mxu0 %v371
    %855 = vmatpush1.msra.mxu0 %v370
    %856 = vmatprep.subr.mxu0 %v373
    %857 = vmatpush1.msra.mxu0 %v372
    %858 = vmatprep.subr.mxu0 %v375
    %859 = vmatpush1.msra.mxu0 %v374
    %860 = vmatprep.subr.mxu0 %v377
    %861 = vmatpush1.msra.mxu0 %v376
    %862 = vmatprep.subr.mxu0 %v379
    %863 = vmatpush1.msra.mxu0 %v378
    %864 = vmatprep.subr.mxu0 %v381
    %865 = vmatpush1.msra.mxu0 %v380
    %866 = vmatprep.subr.mxu0 0.0
    %867 = vmatpush1.msra.mxu0 0.0
    %868 = vmatprep.subr.mxu0 0.0
    %869 = vmatpush1.msra.mxu0 0.0
    %870 = vmatprep.subr.mxu0 0.0
    %871 = vmatpush1.msra.mxu0 0.0
    %872 = vmatprep.subr.mxu0 0.0
    %873 = vmatpush1.msra.mxu0 0.0
    %874 = vmatprep.subr.mxu0 0.0
    %875 = vmatpush1.msra.mxu0 0.0
    %876 = vmatprep.subr.mxu0 0.0
    %877 = vmatpush1.msra.mxu0 0.0
    %878 = vmatprep.subr.mxu0 0.0
    %879 = vmatpush1.msra.mxu0 0.0
    %880 = vmatprep.subr.mxu0 0.0
    %881 = vmatpush1.msra.mxu0 0.0
    %882 = vmatprep.subr.mxu0 0.0
    %883 = vmatpush1.msra.mxu0 0.0
    %884 = vmatprep.subr.mxu0 0.0
    %885 = vmatpush1.msra.mxu0 0.0
    %886 = vmatprep.subr.mxu0 0.0
    %887 = vmatpush1.msra.mxu0 0.0
    %888 = vmatprep.subr.mxu0 0.0
    %889 = vmatpush1.msra.mxu0 0.0
    %890 = vmatprep.subr.mxu0 0.0
    %891 = vmatpush1.msra.mxu0 0.0
    %892 = vmatprep.subr.mxu0 0.0
    %893 = vmatpush1.msra.mxu0 0.0
    %894 = vmatprep.subr.mxu0 0.0
    %895 = vmatpush1.msra.mxu0 0.0
    %896 = vmatprep.subr.mxu0 0.0
    %897 = vmatpush1.msra.mxu0 0.0
    %898 = vmatprep.subr.mxu0 0.0
    %899 = vmatpush1.msra.mxu0 0.0
    %900 = vmatprep.subr.mxu0 0.0
    %901 = vmatpush1.msra.mxu0 0.0
    %902 = vmatprep.subr.mxu0 0.0
    %903 = vmatpush1.msra.mxu0 0.0
    %904 = vmatprep.subr.mxu0 0.0
    %905 = vmatpush1.msra.mxu0 0.0
    %906 = vmatprep.subr.mxu0 0.0
    %907 = vmatpush1.msra.mxu0 0.0
    %908 = vmatprep.subr.mxu0 0.0
    %909 = vmatpush1.msra.mxu0 0.0
    %910 = vmatprep.subr.mxu0 0.0
    %911 = vmatpush1.msra.mxu0 0.0
    %912 = vmatprep.subr.mxu0 0.0
    %913 = vmatpush1.msra.mxu0 0.0
    %914 = vmatprep.mubr.f32.mxu0 0.0
    %915 = vmatmul.mubr.f32.gmra.mrb[0].mxu0 %v848
    %v916 = vpop.f32.mrb[0].mxu0
    %v917 = vadd.f32 0.0, %v916
    %v918 = vpop.f32.mrb[0].mxu0
    %v919 = vadd.f32 0.0, %v918
    %920 = vdwg.mxu0
    %v921 = vadd.f32 %v845, %v917
    %v922 = vadd.f32 %v846, %v919
    %v923 = vxor.u32 %v921, 2147483648
    %v924 = vxor.u32 %v922, 2147483648
    %v925 = vmul.f32 %v923, 1.442695
    %v926 = vpow.pop %v925
    %v927 = vmul.f32 %v924, 1.442695
    %v928 = vpow.pop %v927
    %v929 = vadd.f32 %v926, 1.0
    %v930 = vadd.f32 %v928, 1.0
    %v931 = vrcp.pop %v929
    %v932 = vmul.f32 1.0, %v931
    %v933 = vrcp.pop %v930
    %v934 = vmul.f32 1.0, %v933
    %v935 = vtanh.pop %v922
    %v936 = vmul.f32 %v932, %v732
    %938 = vrot.lane.b32.xlu0 %v935, 64
    %v939 = vpop.permute.xlu0 %938
    %v941 = vmul.f32 %v932, %v939
    %943 = vrot.lane.b32.xlu0 %v941, 64
    %v944 = vpop.permute.xlu0 %943
    %v946 = vadd.f32 %v936, %v944
    %v947 = vtanh.pop %v946
    %949 = vrot.lane.b32.xlu0 %v947, 64
    %v950 = vpop.permute.xlu0 %949
    %v952 = vmul.f32 %v934, %v950
    %954 = vrot.lane.b32.xlu0 %v844, 64
    %v955 = vpop.permute.xlu0 %954
    %v957 = vsel %vm269, %v952, %v955
    %958 = vmatprep.subr.mxu0 %v495
    %959 = vmatpush1.msra.mxu0 %v494
    %960 = vmatprep.subr.mxu0 %v497
    %961 = vmatpush1.msra.mxu0 %v496
    %962 = vmatprep.subr.mxu0 %v499
    %963 = vmatpush1.msra.mxu0 %v498
    %964 = vmatprep.subr.mxu0 %v501
    %965 = vmatpush1.msra.mxu0 %v500
    %966 = vmatprep.subr.mxu0 %v503
    %967 = vmatpush1.msra.mxu0 %v502
    %968 = vmatprep.subr.mxu0 %v505
    %969 = vmatpush1.msra.mxu0 %v504
    %970 = vmatprep.subr.mxu0 %v507
    %971 = vmatpush1.msra.mxu0 %v506
    %972 = vmatprep.subr.mxu0 %v509
    %973 = vmatpush1.msra.mxu0 %v508
    %974 = vmatprep.subr.mxu0 %v511
    %975 = vmatpush1.msra.mxu0 %v510
    %976 = vmatprep.subr.mxu0 %v513
    %977 = vmatpush1.msra.mxu0 %v512
    %978 = vmatprep.subr.mxu0 %v515
    %979 = vmatpush1.msra.mxu0 %v514
    %980 = vmatprep.subr.mxu0 %v517
    %981 = vmatpush1.msra.mxu0 %v516
    %982 = vmatprep.subr.mxu0 %v519
    %983 = vmatpush1.msra.mxu0 %v518
    %984 = vmatprep.subr.mxu0 %v521
    %985 = vmatpush1.msra.mxu0 %v520
    %986 = vmatprep.subr.mxu0 %v523
    %987 = vmatpush1.msra.mxu0 %v522
    %988 = vmatprep.subr.mxu0 %v525
    %989 = vmatpush1.msra.mxu0 %v524
    %990 = vmatprep.subr.mxu0 0.0
    %991 = vmatpush1.msra.mxu0 0.0
    %992 = vmatprep.subr.mxu0 0.0
    %993 = vmatpush1.msra.mxu0 0.0
    %994 = vmatprep.subr.mxu0 0.0
    %995 = vmatpush1.msra.mxu0 0.0
    %996 = vmatprep.subr.mxu0 0.0
    %997 = vmatpush1.msra.mxu0 0.0
    %998 = vmatprep.subr.mxu0 0.0
    %999 = vmatpush1.msra.mxu0 0.0
    %1000 = vmatprep.subr.mxu0 0.0
    %1001 = vmatpush1.msra.mxu0 0.0
    %1002 = vmatprep.subr.mxu0 0.0
    %1003 = vmatpush1.msra.mxu0 0.0
    %1004 = vmatprep.subr.mxu0 0.0
    %1005 = vmatpush1.msra.mxu0 0.0
    %1006 = vmatprep.subr.mxu0 0.0
    %1007 = vmatpush1.msra.mxu0 0.0
    %1008 = vmatprep.subr.mxu0 0.0
    %1009 = vmatpush1.msra.mxu0 0.0
    %1010 = vmatprep.subr.mxu0 0.0
    %1011 = vmatpush1.msra.mxu0 0.0
    %1012 = vmatprep.subr.mxu0 0.0
    %1013 = vmatpush1.msra.mxu0 0.0
    %1014 = vmatprep.subr.mxu0 0.0
    %1015 = vmatpush1.msra.mxu0 0.0
    %1016 = vmatprep.subr.mxu0 0.0
    %1017 = vmatpush1.msra.mxu0 0.0
    %1018 = vmatprep.subr.mxu0 0.0
    %1019 = vmatpush1.msra.mxu0 0.0
    %1020 = vmatprep.subr.mxu0 0.0
    %1021 = vmatpush1.msra.mxu0 0.0
    %1022 = vmatprep.mubr.f32.mxu0 0.0
    %1023 = vmatmul.mubr.f32.gmra.mrb[0].mxu0 %v957
    %v1024 = vpop.f32.mrb[0].mxu0
    %v1025 = vadd.f32 %v262, %v1024
    %v1026 = vpop.f32.mrb[0].mxu0
    %v1027 = vadd.f32 %v266, %v1026
    %1028 = vdwg.mxu0
    %v1029 = vxor.u32 %v1025, 2147483648
    %v1030 = vxor.u32 %v1027, 2147483648
    %v1031 = vmul.f32 %v1029, 1.442695
    %v1032 = vpow.pop %v1031
    %v1033 = vmul.f32 %v1030, 1.442695
    %v1034 = vpow.pop %v1033
    %v1035 = vadd.f32 %v1032, 1.0
    %v1036 = vadd.f32 %v1034, 1.0
    %v1037 = vrcp.pop %v1035
    %v1038 = vmul.f32 1.0, %v1037
    %v1039 = vrcp.pop %v1036
    %v1040 = vmul.f32 1.0, %v1039
    %v1041 = vtanh.pop %v1027
    %v1042 = vmul.f32 %v1038, %v838
    %1044 = vrot.lane.b32.xlu0 %v1041, 64
    %v1045 = vpop.permute.xlu0 %1044
    %v1047 = vmul.f32 %v1038, %v1045
    %1049 = vrot.lane.b32.xlu0 %v1047, 64
    %v1050 = vpop.permute.xlu0 %1049
    %v1052 = vadd.f32 %v1042, %v1050
    %v1053 = vtanh.pop %v1052
    %1055 = vrot.lane.b32.xlu0 %v1053, 64
    %v1056 = vpop.permute.xlu0 %1055
    %v1058 = vmul.f32 %v1040, %v1056
    %v1059 = vld [vmem:[#allocation2 + $0x40] sm:$0xff]
    %v1060 = vld [vmem:[#allocation2 + $0x48] sm:$0xff]
    %v1062 = vsel %vm269, %v952, 0
    %1064 = vmatprep.subr.mxu0 %v367
    %1065 = vmatpush1.msra.mxu0 %v366
    %1066 = vmatprep.subr.mxu0 %v369
    %1067 = vmatpush1.msra.mxu0 %v368
    %1068 = vmatprep.subr.mxu0 %v371
    %1069 = vmatpush1.msra.mxu0 %v370
    %1070 = vmatprep.subr.mxu0 %v373
    %1071 = vmatpush1.msra.mxu0 %v372
    %1072 = vmatprep.subr.mxu0 %v375
    %1073 = vmatpush1.msra.mxu0 %v374
    %1074 = vmatprep.subr.mxu0 %v377
    %1075 = vmatpush1.msra.mxu0 %v376
    %1076 = vmatprep.subr.mxu0 %v379
    %1077 = vmatpush1.msra.mxu0 %v378
    %1078 = vmatprep.subr.mxu0 %v381
    %1079 = vmatpush1.msra.mxu0 %v380
    %1080 = vmatprep.subr.mxu0 0.0
    %1081 = vmatpush1.msra.mxu0 0.0
    %1082 = vmatprep.subr.mxu0 0.0
    %1083 = vmatpush1.msra.mxu0 0.0
    %1084 = vmatprep.subr.mxu0 0.0
    %1085 = vmatpush1.msra.mxu0 0.0
    %1086 = vmatprep.subr.mxu0 0.0
    %1087 = vmatpush1.msra.mxu0 0.0
    %1088 = vmatprep.subr.mxu0 0.0
    %1089 = vmatpush1.msra.mxu0 0.0
    %1090 = vmatprep.subr.mxu0 0.0
    %1091 = vmatpush1.msra.mxu0 0.0
    %1092 = vmatprep.subr.mxu0 0.0
    %1093 = vmatpush1.msra.mxu0 0.0
    %1094 = vmatprep.subr.mxu0 0.0
    %1095 = vmatpush1.msra.mxu0 0.0
    %1096 = vmatprep.subr.mxu0 0.0
    %1097 = vmatpush1.msra.mxu0 0.0
    %1098 = vmatprep.subr.mxu0 0.0
    %1099 = vmatpush1.msra.mxu0 0.0
    %1100 = vmatprep.subr.mxu0 0.0
    %1101 = vmatpush1.msra.mxu0 0.0
    %1102 = vmatprep.subr.mxu0 0.0
    %1103 = vmatpush1.msra.mxu0 0.0
    %1104 = vmatprep.subr.mxu0 0.0
    %1105 = vmatpush1.msra.mxu0 0.0
    %1106 = vmatprep.subr.mxu0 0.0
    %1107 = vmatpush1.msra.mxu0 0.0
    %1108 = vmatprep.subr.mxu0 0.0
    %1109 = vmatpush1.msra.mxu0 0.0
    %1110 = vmatprep.subr.mxu0 0.0
    %1111 = vmatpush1.msra.mxu0 0.0
    %1112 = vmatprep.subr.mxu0 0.0
    %1113 = vmatpush1.msra.mxu0 0.0
    %1114 = vmatprep.subr.mxu0 0.0
    %1115 = vmatpush1.msra.mxu0 0.0
    %1116 = vmatprep.subr.mxu0 0.0
    %1117 = vmatpush1.msra.mxu0 0.0
    %1118 = vmatprep.subr.mxu0 0.0
    %1119 = vmatpush1.msra.mxu0 0.0
    %1120 = vmatprep.subr.mxu0 0.0
    %1121 = vmatpush1.msra.mxu0 0.0
    %1122 = vmatprep.subr.mxu0 0.0
    %1123 = vmatpush1.msra.mxu0 0.0
    %1124 = vmatprep.subr.mxu0 0.0
    %1125 = vmatpush1.msra.mxu0 0.0
    %1126 = vmatprep.subr.mxu0 0.0
    %1127 = vmatpush1.msra.mxu0 0.0
    %1128 = vmatprep.mubr.f32.mxu0 0.0
    %1129 = vmatmul.mubr.f32.gmra.mrb[0].mxu0 %v1062
    %v1130 = vpop.f32.mrb[0].mxu0
    %v1131 = vadd.f32 0.0, %v1130
    %v1132 = vpop.f32.mrb[0].mxu0
    %v1133 = vadd.f32 0.0, %v1132
    %1134 = vdwg.mxu0
    %v1135 = vadd.f32 %v1059, %v1131
    %v1136 = vadd.f32 %v1060, %v1133
    %v1137 = vxor.u32 %v1135, 2147483648
    %v1138 = vxor.u32 %v1136, 2147483648
    %v1139 = vmul.f32 %v1137, 1.442695
    %v1140 = vpow.pop %v1139
    %v1141 = vmul.f32 %v1138, 1.442695
    %v1142 = vpow.pop %v1141
    %v1143 = vadd.f32 %v1140, 1.0
    %v1144 = vadd.f32 %v1142, 1.0
    %v1145 = vrcp.pop %v1143
    %v1146 = vmul.f32 1.0, %v1145
    %v1147 = vrcp.pop %v1144
    %v1148 = vmul.f32 1.0, %v1147
    %v1149 = vtanh.pop %v1136
    %v1150 = vmul.f32 %v1146, %v946
    %1152 = vrot.lane.b32.xlu0 %v1149, 64
    %v1153 = vpop.permute.xlu0 %1152
    %v1155 = vmul.f32 %v1146, %v1153
    %1157 = vrot.lane.b32.xlu0 %v1155, 64
    %v1158 = vpop.permute.xlu0 %1157
    %v1160 = vadd.f32 %v1150, %v1158
    %v1161 = vtanh.pop %v1160
    %1163 = vrot.lane.b32.xlu0 %v1161, 64
    %v1164 = vpop.permute.xlu0 %1163
    %v1166 = vmul.f32 %v1148, %v1164
    %1168 = vrot.lane.b32.xlu0 %v1058, 64
    %v1169 = vpop.permute.xlu0 %1168
    %v1171 = vsel %vm269, %v1166, %v1169
    %1172 = vmatprep.subr.mxu0 %v495
    %1173 = vmatpush1.msra.mxu0 %v494
    %1174 = vmatprep.subr.mxu0 %v497
    %1175 = vmatpush1.msra.mxu0 %v496
    %1176 = vmatprep.subr.mxu0 %v499
    %1177 = vmatpush1.msra.mxu0 %v498
    %1178 = vmatprep.subr.mxu0 %v501
    %1179 = vmatpush1.msra.mxu0 %v500
    %1180 = vmatprep.subr.mxu0 %v503
    %1181 = vmatpush1.msra.mxu0 %v502
    %1182 = vmatprep.subr.mxu0 %v505
    %1183 = vmatpush1.msra.mxu0 %v504
    %1184 = vmatprep.subr.mxu0 %v507
    %1185 = vmatpush1.msra.mxu0 %v506
    %1186 = vmatprep.subr.mxu0 %v509
    %1187 = vmatpush1.msra.mxu0 %v508
    %1188 = vmatprep.subr.mxu0 %v511
    %1189 = vmatpush1.msra.mxu0 %v510
    %1190 = vmatprep.subr.mxu0 %v513
    %1191 = vmatpush1.msra.mxu0 %v512
    %1192 = vmatprep.subr.mxu0 %v515
    %1193 = vmatpush1.msra.mxu0 %v514
    %1194 = vmatprep.subr.mxu0 %v517
    %1195 = vmatpush1.msra.mxu0 %v516
    %1196 = vmatprep.subr.mxu0 %v519
    %1197 = vmatpush1.msra.mxu0 %v518
    %1198 = vmatprep.subr.mxu0 %v521
    %1199 = vmatpush1.msra.mxu0 %v520
    %1200 = vmatprep.subr.mxu0 %v523
    %1201 = vmatpush1.msra.mxu0 %v522
    %1202 = vmatprep.subr.mxu0 %v525
    %1203 = vmatpush1.msra.mxu0 %v524
    %1204 = vmatprep.subr.mxu0 0.0
    %1205 = vmatpush1.msra.mxu0 0.0
    %1206 = vmatprep.subr.mxu0 0.0
    %1207 = vmatpush1.msra.mxu0 0.0
    %1208 = vmatprep.subr.mxu0 0.0
    %1209 = vmatpush1.msra.mxu0 0.0
    %1210 = vmatprep.subr.mxu0 0.0
    %1211 = vmatpush1.msra.mxu0 0.0
    %1212 = vmatprep.subr.mxu0 0.0
    %1213 = vmatpush1.msra.mxu0 0.0
    %1214 = vmatprep.subr.mxu0 0.0
    %1215 = vmatpush1.msra.mxu0 0.0
    %1216 = vmatprep.subr.mxu0 0.0
    %1217 = vmatpush1.msra.mxu0 0.0
    %1218 = vmatprep.subr.mxu0 0.0
    %1219 = vmatpush1.msra.mxu0 0.0
    %1220 = vmatprep.subr.mxu0 0.0
    %1221 = vmatpush1.msra.mxu0 0.0
    %1222 = vmatprep.subr.mxu0 0.0
    %1223 = vmatpush1.msra.mxu0 0.0
    %1224 = vmatprep.subr.mxu0 0.0
    %1225 = vmatpush1.msra.mxu0 0.0
    %1226 = vmatprep.subr.mxu0 0.0
    %1227 = vmatpush1.msra.mxu0 0.0
    %1228 = vmatprep.subr.mxu0 0.0
    %1229 = vmatpush1.msra.mxu0 0.0
    %1230 = vmatprep.subr.mxu0 0.0
    %1231 = vmatpush1.msra.mxu0 0.0
    %1232 = vmatprep.subr.mxu0 0.0
    %1233 = vmatpush1.msra.mxu0 0.0
    %1234 = vmatprep.subr.mxu0 0.0
    %1235 = vmatpush1.msra.mxu0 0.0
    %1236 = vmatprep.mubr.f32.mxu0 0.0
    %1237 = vmatmul.mubr.f32.gmra.mrb[0].mxu0 %v1171
    %v1238 = vpop.f32.mrb[0].mxu0
    %v1239 = vadd.f32 %v262, %v1238
    %v1240 = vpop.f32.mrb[0].mxu0
    %v1241 = vadd.f32 %v266, %v1240
    %1242 = vdwg.mxu0
    %v1243 = vxor.u32 %v1239, 2147483648
    %v1244 = vxor.u32 %v1241, 2147483648
    %v1245 = vmul.f32 %v1243, 1.442695
    %v1246 = vpow.pop %v1245
    %v1247 = vmul.f32 %v1244, 1.442695
    %v1248 = vpow.pop %v1247
    %v1249 = vadd.f32 %v1246, 1.0
    %v1250 = vadd.f32 %v1248, 1.0
    %v1251 = vrcp.pop %v1249
    %v1252 = vmul.f32 1.0, %v1251
    %v1253 = vrcp.pop %v1250
    %v1254 = vmul.f32 1.0, %v1253
    %v1255 = vtanh.pop %v1241
    %v1256 = vmul.f32 %v1252, %v1052
    %1258 = vrot.lane.b32.xlu0 %v1255, 64
    %v1259 = vpop.permute.xlu0 %1258
    %v1261 = vmul.f32 %v1252, %v1259
    %1263 = vrot.lane.b32.xlu0 %v1261, 64
    %v1264 = vpop.permute.xlu0 %1263
    %v1266 = vadd.f32 %v1256, %v1264
    %v1267 = vtanh.pop %v1266
    %1269 = vrot.lane.b32.xlu0 %v1267, 64
    %v1270 = vpop.permute.xlu0 %1269
    %v1272 = vmul.f32 %v1254, %v1270
    %v1273 = vld [vmem:[#allocation2 + $0x50] sm:$0xff]
    %v1274 = vld [vmem:[#allocation2 + $0x58] sm:$0xff]
    %v1276 = vsel %vm269, %v1166, 0
    %1278 = vmatprep.subr.mxu0 %v367
    %1279 = vmatpush1.msra.mxu0 %v366
    %1280 = vmatprep.subr.mxu0 %v369
    %1281 = vmatpush1.msra.mxu0 %v368
    %1282 = vmatprep.subr.mxu0 %v371
    %1283 = vmatpush1.msra.mxu0 %v370
    %1284 = vmatprep.subr.mxu0 %v373
    %1285 = vmatpush1.msra.mxu0 %v372
    %1286 = vmatprep.subr.mxu0 %v375
    %1287 = vmatpush1.msra.mxu0 %v374
    %1288 = vmatprep.subr.mxu0 %v377
    %1289 = vmatpush1.msra.mxu0 %v376
    %1290 = vmatprep.subr.mxu0 %v379
    %1291 = vmatpush1.msra.mxu0 %v378
    %1292 = vmatprep.subr.mxu0 %v381
    %1293 = vmatpush1.msra.mxu0 %v380
    %1294 = vmatprep.subr.mxu0 0.0
    %1295 = vmatpush1.msra.mxu0 0.0
    %1296 = vmatprep.subr.mxu0 0.0
    %1297 = vmatpush1.msra.mxu0 0.0
    %1298 = vmatprep.subr.mxu0 0.0
    %1299 = vmatpush1.msra.mxu0 0.0
    %1300 = vmatprep.subr.mxu0 0.0
    %1301 = vmatpush1.msra.mxu0 0.0
    %1302 = vmatprep.subr.mxu0 0.0
    %1303 = vmatpush1.msra.mxu0 0.0
    %1304 = vmatprep.subr.mxu0 0.0
    %1305 = vmatpush1.msra.mxu0 0.0
    %1306 = vmatprep.subr.mxu0 0.0
    %1307 = vmatpush1.msra.mxu0 0.0
    %1308 = vmatprep.subr.mxu0 0.0
    %1309 = vmatpush1.msra.mxu0 0.0
    %1310 = vmatprep.subr.mxu0 0.0
    %1311 = vmatpush1.msra.mxu0 0.0
    %1312 = vmatprep.subr.mxu0 0.0
    %1313 = vmatpush1.msra.mxu0 0.0
    %1314 = vmatprep.subr.mxu0 0.0
    %1315 = vmatpush1.msra.mxu0 0.0
    %1316 = vmatprep.subr.mxu0 0.0
    %1317 = vmatpush1.msra.mxu0 0.0
    %1318 = vmatprep.subr.mxu0 0.0
    %1319 = vmatpush1.msra.mxu0 0.0
    %1320 = vmatprep.subr.mxu0 0.0
    %1321 = vmatpush1.msra.mxu0 0.0
    %1322 = vmatprep.subr.mxu0 0.0
    %1323 = vmatpush1.msra.mxu0 0.0
    %1324 = vmatprep.subr.mxu0 0.0
    %1325 = vmatpush1.msra.mxu0 0.0
    %1326 = vmatprep.subr.mxu0 0.0
    %1327 = vmatpush1.msra.mxu0 0.0
    %1328 = vmatprep.subr.mxu0 0.0
    %1329 = vmatpush1.msra.mxu0 0.0
    %1330 = vmatprep.subr.mxu0 0.0
    %1331 = vmatpush1.msra.mxu0 0.0
    %1332 = vmatprep.subr.mxu0 0.0
    %1333 = vmatpush1.msra.mxu0 0.0
    %1334 = vmatprep.subr.mxu0 0.0
    %1335 = vmatpush1.msra.mxu0 0.0
    %1336 = vmatprep.subr.mxu0 0.0
    %1337 = vmatpush1.msra.mxu0 0.0
    %1338 = vmatprep.subr.mxu0 0.0
    %1339 = vmatpush1.msra.mxu0 0.0
    %1340 = vmatprep.subr.mxu0 0.0
    %1341 = vmatpush1.msra.mxu0 0.0
    %1342 = vmatprep.mubr.f32.mxu0 0.0
    %1343 = vmatmul.mubr.f32.gmra.mrb[0].mxu0 %v1276
    %v1344 = vpop.f32.mrb[0].mxu0
    %v1345 = vadd.f32 0.0, %v1344
    %v1346 = vpop.f32.mrb[0].mxu0
    %v1347 = vadd.f32 0.0, %v1346
    %1348 = vdwg.mxu0
    %v1349 = vadd.f32 %v1273, %v1345
    %v1350 = vadd.f32 %v1274, %v1347
    %v1351 = vxor.u32 %v1349, 2147483648
    %v1352 = vxor.u32 %v1350, 2147483648
    %v1353 = vmul.f32 %v1351, 1.442695
    %v1354 = vpow.pop %v1353
    %v1355 = vmul.f32 %v1352, 1.442695
    %v1356 = vpow.pop %v1355
    %v1357 = vadd.f32 %v1354, 1.0
    %v1358 = vadd.f32 %v1356, 1.0
    %v1359 = vrcp.pop %v1357
    %v1360 = vmul.f32 1.0, %v1359
    %v1361 = vrcp.pop %v1358
    %v1362 = vmul.f32 1.0, %v1361
    %v1363 = vtanh.pop %v1350
    %v1364 = vmul.f32 %v1360, %v1160
    %1366 = vrot.lane.b32.xlu0 %v1363, 64
    %v1367 = vpop.permute.xlu0 %1366
    %v1369 = vmul.f32 %v1360, %v1367
    %1371 = vrot.lane.b32.xlu0 %v1369, 64
    %v1372 = vpop.permute.xlu0 %1371
    %v1374 = vadd.f32 %v1364, %v1372
    %v1375 = vtanh.pop %v1374
    %1377 = vrot.lane.b32.xlu0 %v1375, 64
    %v1378 = vpop.permute.xlu0 %1377
    %v1380 = vmul.f32 %v1362, %v1378
    %1382 = vrot.lane.b32.xlu0 %v1272, 64
    %v1383 = vpop.permute.xlu0 %1382
    %v1385 = vsel %vm269, %v1380, %v1383
    %1386 = vmatprep.subr.mxu0 %v495
    %1387 = vmatpush1.msra.mxu0 %v494
    %1388 = vmatprep.subr.mxu0 %v497
    %1389 = vmatpush1.msra.mxu0 %v496
    %1390 = vmatprep.subr.mxu0 %v499
    %1391 = vmatpush1.msra.mxu0 %v498
    %1392 = vmatprep.subr.mxu0 %v501
    %1393 = vmatpush1.msra.mxu0 %v500
    %1394 = vmatprep.subr.mxu0 %v503
    %1395 = vmatpush1.msra.mxu0 %v502
    %1396 = vmatprep.subr.mxu0 %v505
    %1397 = vmatpush1.msra.mxu0 %v504
    %1398 = vmatprep.subr.mxu0 %v507
    %1399 = vmatpush1.msra.mxu0 %v506
    %1400 = vmatprep.subr.mxu0 %v509
    %1401 = vmatpush1.msra.mxu0 %v508
    %1402 = vmatprep.subr.mxu0 %v511
    %1403 = vmatpush1.msra.mxu0 %v510
    %1404 = vmatprep.subr.mxu0 %v513
    %1405 = vmatpush1.msra.mxu0 %v512
    %1406 = vmatprep.subr.mxu0 %v515
    %1407 = vmatpush1.msra.mxu0 %v514
    %1408 = vmatprep.subr.mxu0 %v517
    %1409 = vmatpush1.msra.mxu0 %v516
    %1410 = vmatprep.subr.mxu0 %v519
    %1411 = vmatpush1.msra.mxu0 %v518
    %1412 = vmatprep.subr.mxu0 %v521
    %1413 = vmatpush1.msra.mxu0 %v520
    %1414 = vmatprep.subr.mxu0 %v523
    %1415 = vmatpush1.msra.mxu0 %v522
    %1416 = vmatprep.subr.mxu0 %v525
    %1417 = vmatpush1.msra.mxu0 %v524
    %1418 = vmatprep.subr.mxu0 0.0
    %1419 = vmatpush1.msra.mxu0 0.0
    %1420 = vmatprep.subr.mxu0 0.0
    %1421 = vmatpush1.msra.mxu0 0.0
    %1422 = vmatprep.subr.mxu0 0.0
    %1423 = vmatpush1.msra.mxu0 0.0
    %1424 = vmatprep.subr.mxu0 0.0
    %1425 = vmatpush1.msra.mxu0 0.0
    %1426 = vmatprep.subr.mxu0 0.0
    %1427 = vmatpush1.msra.mxu0 0.0
    %1428 = vmatprep.subr.mxu0 0.0
    %1429 = vmatpush1.msra.mxu0 0.0
    %1430 = vmatprep.subr.mxu0 0.0
    %1431 = vmatpush1.msra.mxu0 0.0
    %1432 = vmatprep.subr.mxu0 0.0
    %1433 = vmatpush1.msra.mxu0 0.0
    %1434 = vmatprep.subr.mxu0 0.0
    %1435 = vmatpush1.msra.mxu0 0.0
    %1436 = vmatprep.subr.mxu0 0.0
    %1437 = vmatpush1.msra.mxu0 0.0
    %1438 = vmatprep.subr.mxu0 0.0
    %1439 = vmatpush1.msra.mxu0 0.0
    %1440 = vmatprep.subr.mxu0 0.0
    %1441 = vmatpush1.msra.mxu0 0.0
    %1442 = vmatprep.subr.mxu0 0.0
    %1443 = vmatpush1.msra.mxu0 0.0
    %1444 = vmatprep.subr.mxu0 0.0
    %1445 = vmatpush1.msra.mxu0 0.0
    %1446 = vmatprep.subr.mxu0 0.0
    %1447 = vmatpush1.msra.mxu0 0.0
    %1448 = vmatprep.subr.mxu0 0.0
    %1449 = vmatpush1.msra.mxu0 0.0
    %1450 = vmatprep.mubr.f32.mxu0 0.0
    %1451 = vmatmul.mubr.f32.gmra.mrb[0].mxu0 %v1385
    %v1452 = vpop.f32.mrb[0].mxu0
    %v1453 = vadd.f32 %v262, %v1452
    %v1454 = vpop.f32.mrb[0].mxu0
    %v1455 = vadd.f32 %v266, %v1454
    %1456 = vdwg.mxu0
    %v1457 = vxor.u32 %v1453, 2147483648
    %v1458 = vxor.u32 %v1455, 2147483648
    %v1459 = vmul.f32 %v1457, 1.442695
    %v1460 = vpow.pop %v1459
    %v1461 = vmul.f32 %v1458, 1.442695
    %v1462 = vpow.pop %v1461
    %v1463 = vadd.f32 %v1460, 1.0
    %v1464 = vadd.f32 %v1462, 1.0
    %v1465 = vrcp.pop %v1463
    %v1466 = vmul.f32 1.0, %v1465
    %v1467 = vrcp.pop %v1464
    %v1468 = vmul.f32 1.0, %v1467
    %v1469 = vtanh.pop %v1455
    %v1470 = vmul.f32 %v1466, %v1266
    %1472 = vrot.lane.b32.xlu0 %v1469, 64
    %v1473 = vpop.permute.xlu0 %1472
    %v1475 = vmul.f32 %v1466, %v1473
    %1477 = vrot.lane.b32.xlu0 %v1475, 64
    %v1478 = vpop.permute.xlu0 %1477
    %v1480 = vadd.f32 %v1470, %v1478
    %v1481 = vtanh.pop %v1480
    %1483 = vrot.lane.b32.xlu0 %v1481, 64
    %v1484 = vpop.permute.xlu0 %1483
    %v1486 = vmul.f32 %v1468, %v1484
    %v1487 = vld [vmem:[#allocation2 + $0x60] sm:$0xff]
    %v1488 = vld [vmem:[#allocation2 + $0x68] sm:$0xff]
    %v1490 = vsel %vm269, %v1380, 0
    %1492 = vmatprep.subr.mxu0 %v367
    %1493 = vmatpush1.msra.mxu0 %v366
    %1494 = vmatprep.subr.mxu0 %v369
    %1495 = vmatpush1.msra.mxu0 %v368
    %1496 = vmatprep.subr.mxu0 %v371
    %1497 = vmatpush1.msra.mxu0 %v370
    %1498 = vmatprep.subr.mxu0 %v373
    %1499 = vmatpush1.msra.mxu0 %v372
    %1500 = vmatprep.subr.mxu0 %v375
    %1501 = vmatpush1.msra.mxu0 %v374
    %1502 = vmatprep.subr.mxu0 %v377
    %1503 = vmatpush1.msra.mxu0 %v376
    %1504 = vmatprep.subr.mxu0 %v379
    %1505 = vmatpush1.msra.mxu0 %v378
    %1506 = vmatprep.subr.mxu0 %v381
    %1507 = vmatpush1.msra.mxu0 %v380
    %1508 = vmatprep.subr.mxu0 0.0
    %1509 = vmatpush1.msra.mxu0 0.0
    %1510 = vmatprep.subr.mxu0 0.0
    %1511 = vmatpush1.msra.mxu0 0.0
    %1512 = vmatprep.subr.mxu0 0.0
    %1513 = vmatpush1.msra.mxu0 0.0
    %1514 = vmatprep.subr.mxu0 0.0
    %1515 = vmatpush1.msra.mxu0 0.0
    %1516 = vmatprep.subr.mxu0 0.0
    %1517 = vmatpush1.msra.mxu0 0.0
    %1518 = vmatprep.subr.mxu0 0.0
    %1519 = vmatpush1.msra.mxu0 0.0
    %1520 = vmatprep.subr.mxu0 0.0
    %1521 = vmatpush1.msra.mxu0 0.0
    %1522 = vmatprep.subr.mxu0 0.0
    %1523 = vmatpush1.msra.mxu0 0.0
    %1524 = vmatprep.subr.mxu0 0.0
    %1525 = vmatpush1.msra.mxu0 0.0
    %1526 = vmatprep.subr.mxu0 0.0
    %1527 = vmatpush1.msra.mxu0 0.0
    %1528 = vmatprep.subr.mxu0 0.0
    %1529 = vmatpush1.msra.mxu0 0.0
    %1530 = vmatprep.subr.mxu0 0.0
    %1531 = vmatpush1.msra.mxu0 0.0
    %1532 = vmatprep.subr.mxu0 0.0
    %1533 = vmatpush1.msra.mxu0 0.0
    %1534 = vmatprep.subr.mxu0 0.0
    %1535 = vmatpush1.msra.mxu0 0.0
    %1536 = vmatprep.subr.mxu0 0.0
    %1537 = vmatpush1.msra.mxu0 0.0
    %1538 = vmatprep.subr.mxu0 0.0
    %1539 = vmatpush1.msra.mxu0 0.0
    %1540 = vmatprep.subr.mxu0 0.0
    %1541 = vmatpush1.msra.mxu0 0.0
    %1542 = vmatprep.subr.mxu0 0.0
    %1543 = vmatpush1.msra.mxu0 0.0
    %1544 = vmatprep.subr.mxu0 0.0
    %1545 = vmatpush1.msra.mxu0 0.0
    %1546 = vmatprep.subr.mxu0 0.0
    %1547 = vmatpush1.msra.mxu0 0.0
    %1548 = vmatprep.subr.mxu0 0.0
    %1549 = vmatpush1.msra.mxu0 0.0
    %1550 = vmatprep.subr.mxu0 0.0
    %1551 = vmatpush1.msra.mxu0 0.0
    %1552 = vmatprep.subr.mxu0 0.0
    %1553 = vmatpush1.msra.mxu0 0.0
    %1554 = vmatprep.subr.mxu0 0.0
    %1555 = vmatpush1.msra.mxu0 0.0
    %1556 = vmatprep.mubr.f32.mxu0 0.0
    %1557 = vmatmul.mubr.f32.gmra.mrb[0].mxu0 %v1490
    %v1558 = vpop.f32.mrb[0].mxu0
    %v1559 = vadd.f32 0.0, %v1558
    %v1560 = vpop.f32.mrb[0].mxu0
    %v1561 = vadd.f32 0.0, %v1560
    %1562 = vdwg.mxu0
    %v1563 = vadd.f32 %v1487, %v1559
    %v1564 = vadd.f32 %v1488, %v1561
    %v1565 = vxor.u32 %v1563, 2147483648
    %v1566 = vxor.u32 %v1564, 2147483648
    %v1567 = vmul.f32 %v1565, 1.442695
    %v1568 = vpow.pop %v1567
    %v1569 = vmul.f32 %v1566, 1.442695
    %v1570 = vpow.pop %v1569
    %v1571 = vadd.f32 %v1568, 1.0
    %v1572 = vadd.f32 %v1570, 1.0
    %v1573 = vrcp.pop %v1571
    %v1574 = vmul.f32 1.0, %v1573
    %v1575 = vrcp.pop %v1572
    %v1576 = vmul.f32 1.0, %v1575
    %v1577 = vtanh.pop %v1564
    %v1578 = vmul.f32 %v1574, %v1374
    %1580 = vrot.lane.b32.xlu0 %v1577, 64
    %v1581 = vpop.permute.xlu0 %1580
    %v1583 = vmul.f32 %v1574, %v1581
    %1585 = vrot.lane.b32.xlu0 %v1583, 64
    %v1586 = vpop.permute.xlu0 %1585
    %v1588 = vadd.f32 %v1578, %v1586
    %v1589 = vtanh.pop %v1588
    %1591 = vrot.lane.b32.xlu0 %v1589, 64
    %v1592 = vpop.permute.xlu0 %1591
    %v1594 = vmul.f32 %v1576, %v1592
    %1596 = vrot.lane.b32.xlu0 %v1486, 64
    %v1597 = vpop.permute.xlu0 %1596
    %v1599 = vsel %vm269, %v1594, %v1597
    %1600 = vmatprep.subr.mxu0 %v495
    %1601 = vmatpush1.msra.mxu0 %v494
    %1602 = vmatprep.subr.mxu0 %v497
    %1603 = vmatpush1.msra.mxu0 %v496
    %1604 = vmatprep.subr.mxu0 %v499
    %1605 = vmatpush1.msra.mxu0 %v498
    %1606 = vmatprep.subr.mxu0 %v501
    %1607 = vmatpush1.msra.mxu0 %v500
    %1608 = vmatprep.subr.mxu0 %v503
    %1609 = vmatpush1.msra.mxu0 %v502
    %1610 = vmatprep.subr.mxu0 %v505
    %1611 = vmatpush1.msra.mxu0 %v504
    %1612 = vmatprep.subr.mxu0 %v507
    %1613 = vmatpush1.msra.mxu0 %v506
    %1614 = vmatprep.subr.mxu0 %v509
    %1615 = vmatpush1.msra.mxu0 %v508
    %1616 = vmatprep.subr.mxu0 %v511
    %1617 = vmatpush1.msra.mxu0 %v510
    %1618 = vmatprep.subr.mxu0 %v513
    %1619 = vmatpush1.msra.mxu0 %v512
    %1620 = vmatprep.subr.mxu0 %v515
    %1621 = vmatpush1.msra.mxu0 %v514
    %1622 = vmatprep.subr.mxu0 %v517
    %1623 = vmatpush1.msra.mxu0 %v516
    %1624 = vmatprep.subr.mxu0 %v519
    %1625 = vmatpush1.msra.mxu0 %v518
    %1626 = vmatprep.subr.mxu0 %v521
    %1627 = vmatpush1.msra.mxu0 %v520
    %1628 = vmatprep.subr.mxu0 %v523
    %1629 = vmatpush1.msra.mxu0 %v522
    %1630 = vmatprep.subr.mxu0 %v525
    %1631 = vmatpush1.msra.mxu0 %v524
    %1632 = vmatprep.subr.mxu0 0.0
    %1633 = vmatpush1.msra.mxu0 0.0
    %1634 = vmatprep.subr.mxu0 0.0
    %1635 = vmatpush1.msra.mxu0 0.0
    %1636 = vmatprep.subr.mxu0 0.0
    %1637 = vmatpush1.msra.mxu0 0.0
    %1638 = vmatprep.subr.mxu0 0.0
    %1639 = vmatpush1.msra.mxu0 0.0
    %1640 = vmatprep.subr.mxu0 0.0
    %1641 = vmatpush1.msra.mxu0 0.0
    %1642 = vmatprep.subr.mxu0 0.0
    %1643 = vmatpush1.msra.mxu0 0.0
    %1644 = vmatprep.subr.mxu0 0.0
    %1645 = vmatpush1.msra.mxu0 0.0
    %1646 = vmatprep.subr.mxu0 0.0
    %1647 = vmatpush1.msra.mxu0 0.0
    %1648 = vmatprep.subr.mxu0 0.0
    %1649 = vmatpush1.msra.mxu0 0.0
    %1650 = vmatprep.subr.mxu0 0.0
    %1651 = vmatpush1.msra.mxu0 0.0
    %1652 = vmatprep.subr.mxu0 0.0
    %1653 = vmatpush1.msra.mxu0 0.0
    %1654 = vmatprep.subr.mxu0 0.0
    %1655 = vmatpush1.msra.mxu0 0.0
    %1656 = vmatprep.subr.mxu0 0.0
    %1657 = vmatpush1.msra.mxu0 0.0
    %1658 = vmatprep.subr.mxu0 0.0
    %1659 = vmatpush1.msra.mxu0 0.0
    %1660 = vmatprep.subr.mxu0 0.0
    %1661 = vmatpush1.msra.mxu0 0.0
    %1662 = vmatprep.subr.mxu0 0.0
    %1663 = vmatpush1.msra.mxu0 0.0
    %1664 = vmatprep.mubr.f32.mxu0 0.0
    %1665 = vmatmul.mubr.f32.gmra.mrb[0].mxu0 %v1599
    %v1666 = vpop.f32.mrb[0].mxu0
    %v1667 = vadd.f32 %v262, %v1666
    %v1668 = vpop.f32.mrb[0].mxu0
    %v1669 = vadd.f32 %v266, %v1668
    %1670 = vdwg.mxu0
    %v1671 = vxor.u32 %v1667, 2147483648
    %v1672 = vxor.u32 %v1669, 2147483648
    %v1673 = vmul.f32 %v1671, 1.442695
    %v1674 = vpow.pop %v1673
    %v1675 = vmul.f32 %v1672, 1.442695
    %v1676 = vpow.pop %v1675
    %v1677 = vadd.f32 %v1674, 1.0
    %v1678 = vadd.f32 %v1676, 1.0
    %v1679 = vrcp.pop %v1677
    %v1680 = vmul.f32 1.0, %v1679
    %v1681 = vrcp.pop %v1678
    %v1682 = vmul.f32 1.0, %v1681
    %v1683 = vtanh.pop %v1669
    %v1684 = vmul.f32 %v1680, %v1480
    %1686 = vrot.lane.b32.xlu0 %v1683, 64
    %v1687 = vpop.permute.xlu0 %1686
    %v1689 = vmul.f32 %v1680, %v1687
    %1691 = vrot.lane.b32.xlu0 %v1689, 64
    %v1692 = vpop.permute.xlu0 %1691
    %v1694 = vadd.f32 %v1684, %v1692
    %v1695 = vtanh.pop %v1694
    %1697 = vrot.lane.b32.xlu0 %v1695, 64
    %v1698 = vpop.permute.xlu0 %1697
    %v1700 = vmul.f32 %v1682, %v1698
    %v1701 = vld [vmem:[#allocation2 + $0x70] sm:$0xff]
    %v1702 = vld [vmem:[#allocation2 + $0x78] sm:$0xff]
    %v1704 = vsel %vm269, %v1594, 0
    %1706 = vmatprep.subr.mxu0 %v367
    %1707 = vmatpush1.msra.mxu0 %v366
    %1708 = vmatprep.subr.mxu0 %v369
    %1709 = vmatpush1.msra.mxu0 %v368
    %1710 = vmatprep.subr.mxu0 %v371
    %1711 = vmatpush1.msra.mxu0 %v370
    %1712 = vmatprep.subr.mxu0 %v373
    %1713 = vmatpush1.msra.mxu0 %v372
    %1714 = vmatprep.subr.mxu0 %v375
    %1715 = vmatpush1.msra.mxu0 %v374
    %1716 = vmatprep.subr.mxu0 %v377
    %1717 = vmatpush1.msra.mxu0 %v376
    %1718 = vmatprep.subr.mxu0 %v379
    %1719 = vmatpush1.msra.mxu0 %v378
    %1720 = vmatprep.subr.mxu0 %v381
    %1721 = vmatpush1.msra.mxu0 %v380
    %1722 = vmatprep.subr.mxu0 0.0
    %1723 = vmatpush1.msra.mxu0 0.0
    %1724 = vmatprep.subr.mxu0 0.0
    %1725 = vmatpush1.msra.mxu0 0.0
    %1726 = vmatprep.subr.mxu0 0.0
    %1727 = vmatpush1.msra.mxu0 0.0
    %1728 = vmatprep.subr.mxu0 0.0
    %1729 = vmatpush1.msra.mxu0 0.0
    %1730 = vmatprep.subr.mxu0 0.0
    %1731 = vmatpush1.msra.mxu0 0.0
    %1732 = vmatprep.subr.mxu0 0.0
    %1733 = vmatpush1.msra.mxu0 0.0
    %1734 = vmatprep.subr.mxu0 0.0
    %1735 = vmatpush1.msra.mxu0 0.0
    %1736 = vmatprep.subr.mxu0 0.0
    %1737 = vmatpush1.msra.mxu0 0.0
    %1738 = vmatprep.subr.mxu0 0.0
    %1739 = vmatpush1.msra.mxu0 0.0
    %1740 = vmatprep.subr.mxu0 0.0
    %1741 = vmatpush1.msra.mxu0 0.0
    %1742 = vmatprep.subr.mxu0 0.0
    %1743 = vmatpush1.msra.mxu0 0.0
    %1744 = vmatprep.subr.mxu0 0.0
    %1745 = vmatpush1.msra.mxu0 0.0
    %1746 = vmatprep.subr.mxu0 0.0
    %1747 = vmatpush1.msra.mxu0 0.0
    %1748 = vmatprep.subr.mxu0 0.0
    %1749 = vmatpush1.msra.mxu0 0.0
    %1750 = vmatprep.subr.mxu0 0.0
    %1751 = vmatpush1.msra.mxu0 0.0
    %1752 = vmatprep.subr.mxu0 0.0
    %1753 = vmatpush1.msra.mxu0 0.0
    %1754 = vmatprep.subr.mxu0 0.0
    %1755 = vmatpush1.msra.mxu0 0.0
    %1756 = vmatprep.subr.mxu0 0.0
    %1757 = vmatpush1.msra.mxu0 0.0
    %1758 = vmatprep.subr.mxu0 0.0
    %1759 = vmatpush1.msra.mxu0 0.0
    %1760 = vmatprep.subr.mxu0 0.0
    %1761 = vmatpush1.msra.mxu0 0.0
    %1762 = vmatprep.subr.mxu0 0.0
    %1763 = vmatpush1.msra.mxu0 0.0
    %1764 = vmatprep.subr.mxu0 0.0
    %1765 = vmatpush1.msra.mxu0 0.0
    %1766 = vmatprep.subr.mxu0 0.0
    %1767 = vmatpush1.msra.mxu0 0.0
    %1768 = vmatprep.subr.mxu0 0.0
    %1769 = vmatpush1.msra.mxu0 0.0
    %1770 = vmatprep.mubr.f32.mxu0 0.0
    %1771 = vmatmul.mubr.f32.gmra.mrb[0].mxu0 %v1704
    %v1772 = vpop.f32.mrb[0].mxu0
    %v1773 = vadd.f32 0.0, %v1772
    %v1774 = vpop.f32.mrb[0].mxu0
    %v1775 = vadd.f32 0.0, %v1774
    %1776 = vdwg.mxu0
    %v1777 = vadd.f32 %v1701, %v1773
    %v1778 = vadd.f32 %v1702, %v1775
    %v1779 = vxor.u32 %v1777, 2147483648
    %v1780 = vxor.u32 %v1778, 2147483648
    %v1781 = vmul.f32 %v1779, 1.442695
    %v1782 = vpow.pop %v1781
    %v1783 = vmul.f32 %v1780, 1.442695
    %v1784 = vpow.pop %v1783
    %v1785 = vadd.f32 %v1782, 1.0
    %v1786 = vadd.f32 %v1784, 1.0
    %v1787 = vrcp.pop %v1785
    %v1788 = vmul.f32 1.0, %v1787
    %v1789 = vrcp.pop %v1786
    %v1790 = vmul.f32 1.0, %v1789
    %v1791 = vtanh.pop %v1778
    %v1792 = vmul.f32 %v1788, %v1588
    %1794 = vrot.lane.b32.xlu0 %v1791, 64
    %v1795 = vpop.permute.xlu0 %1794
    %v1797 = vmul.f32 %v1788, %v1795
    %1799 = vrot.lane.b32.xlu0 %v1797, 64
    %v1800 = vpop.permute.xlu0 %1799
    %v1802 = vadd.f32 %v1792, %v1800
    %v1803 = vtanh.pop %v1802
    %1805 = vrot.lane.b32.xlu0 %v1803, 64
    %v1806 = vpop.permute.xlu0 %1805
    %v1808 = vmul.f32 %v1790, %v1806
    %1810 = vrot.lane.b32.xlu0 %v1700, 64
    %v1811 = vpop.permute.xlu0 %1810
    %v1813 = vsel %vm269, %v1808, %v1811
    %1814 = vmatprep.subr.mxu0 %v495
    %1815 = vmatpush1.msra.mxu0 %v494
    %1816 = vmatprep.subr.mxu0 %v497
    %1817 = vmatpush1.msra.mxu0 %v496
    %1818 = vmatprep.subr.mxu0 %v499
    %1819 = vmatpush1.msra.mxu0 %v498
    %1820 = vmatprep.subr.mxu0 %v501
    %1821 = vmatpush1.msra.mxu0 %v500
    %1822 = vmatprep.subr.mxu0 %v503
    %1823 = vmatpush1.msra.mxu0 %v502
    %1824 = vmatprep.subr.mxu0 %v505
    %1825 = vmatpush1.msra.mxu0 %v504
    %1826 = vmatprep.subr.mxu0 %v507
    %1827 = vmatpush1.msra.mxu0 %v506
    %1828 = vmatprep.subr.mxu0 %v509
    %1829 = vmatpush1.msra.mxu0 %v508
    %1830 = vmatprep.subr.mxu0 %v511
    %1831 = vmatpush1.msra.mxu0 %v510
    %1832 = vmatprep.subr.mxu0 %v513
    %1833 = vmatpush1.msra.mxu0 %v512
    %1834 = vmatprep.subr.mxu0 %v515
    %1835 = vmatpush1.msra.mxu0 %v514
    %1836 = vmatprep.subr.mxu0 %v517
    %1837 = vmatpush1.msra.mxu0 %v516
    %1838 = vmatprep.subr.mxu0 %v519
    %1839 = vmatpush1.msra.mxu0 %v518
    %1840 = vmatprep.subr.mxu0 %v521
    %1841 = vmatpush1.msra.mxu0 %v520
    %1842 = vmatprep.subr.mxu0 %v523
    %1843 = vmatpush1.msra.mxu0 %v522
    %1844 = vmatprep.subr.mxu0 %v525
    %1845 = vmatpush1.msra.mxu0 %v524
    %1846 = vmatprep.subr.mxu0 0.0
    %1847 = vmatpush1.msra.mxu0 0.0
    %1848 = vmatprep.subr.mxu0 0.0
    %1849 = vmatpush1.msra.mxu0 0.0
    %1850 = vmatprep.subr.mxu0 0.0
    %1851 = vmatpush1.msra.mxu0 0.0
    %1852 = vmatprep.subr.mxu0 0.0
    %1853 = vmatpush1.msra.mxu0 0.0
    %1854 = vmatprep.subr.mxu0 0.0
    %1855 = vmatpush1.msra.mxu0 0.0
    %1856 = vmatprep.subr.mxu0 0.0
    %1857 = vmatpush1.msra.mxu0 0.0
    %1858 = vmatprep.subr.mxu0 0.0
    %1859 = vmatpush1.msra.mxu0 0.0
    %1860 = vmatprep.subr.mxu0 0.0
    %1861 = vmatpush1.msra.mxu0 0.0
    %1862 = vmatprep.subr.mxu0 0.0
    %1863 = vmatpush1.msra.mxu0 0.0
    %1864 = vmatprep.subr.mxu0 0.0
    %1865 = vmatpush1.msra.mxu0 0.0
    %1866 = vmatprep.subr.mxu0 0.0
    %1867 = vmatpush1.msra.mxu0 0.0
    %1868 = vmatprep.subr.mxu0 0.0
    %1869 = vmatpush1.msra.mxu0 0.0
    %1870 = vmatprep.subr.mxu0 0.0
    %1871 = vmatpush1.msra.mxu0 0.0
    %1872 = vmatprep.subr.mxu0 0.0
    %1873 = vmatpush1.msra.mxu0 0.0
    %1874 = vmatprep.subr.mxu0 0.0
    %1875 = vmatpush1.msra.mxu0 0.0
    %1876 = vmatprep.subr.mxu0 0.0
    %1877 = vmatpush1.msra.mxu0 0.0
    %1878 = vmatprep.mubr.f32.mxu0 0.0
    %1879 = vmatmul.mubr.f32.gmra.mrb[0].mxu0 %v1813
    %v1880 = vpop.f32.mrb[0].mxu0
    %v1881 = vadd.f32 %v262, %v1880
    %v1882 = vpop.f32.mrb[0].mxu0
    %v1883 = vadd.f32 %v266, %v1882
    %1884 = vdwg.mxu0
    %v1885 = vxor.u32 %v1881, 2147483648
    %v1886 = vxor.u32 %v1883, 2147483648
    %v1887 = vmul.f32 %v1885, 1.442695
    %v1888 = vpow.pop %v1887
    %v1889 = vmul.f32 %v1886, 1.442695
    %v1890 = vpow.pop %v1889
    %v1891 = vadd.f32 %v1888, 1.0
    %v1892 = vadd.f32 %v1890, 1.0
    %v1893 = vrcp.pop %v1891
    %v1894 = vmul.f32 1.0, %v1893
    %v1895 = vrcp.pop %v1892
    %v1896 = vmul.f32 1.0, %v1895
    %v1897 = vtanh.pop %v1883
    %v1898 = vmul.f32 %v1894, %v1694
    %1900 = vrot.lane.b32.xlu0 %v1897, 64
    %v1901 = vpop.permute.xlu0 %1900
    %v1903 = vmul.f32 %v1894, %v1901
    %1905 = vrot.lane.b32.xlu0 %v1903, 64
    %v1906 = vpop.permute.xlu0 %1905
    %v1908 = vadd.f32 %v1898, %v1906
    %v1909 = vtanh.pop %v1908
    %1911 = vrot.lane.b32.xlu0 %v1909, 64
    %v1912 = vpop.permute.xlu0 %1911
    %v1914 = vmul.f32 %v1896, %v1912
    %v1915 = vld [vmem:[%s6] sm:$0xff]
    %v1916 = vld [vmem:[%s6 + $0x8] sm:$0xff]
    %v1917 = vld [vmem:[%s6 + $0x10] sm:$0xff]
    %v1918 = vld [vmem:[%s6 + $0x18] sm:$0xff]
    %v1919 = vld [vmem:[%s6 + $0x20] sm:$0xff]
    %v1920 = vld [vmem:[%s6 + $0x28] sm:$0xff]
    %v1921 = vld [vmem:[%s6 + $0x30] sm:$0xff]
    %v1922 = vld [vmem:[%s6 + $0x38] sm:$0xff]
    %v1923 = vld [vmem:[%s7] sm:$0x1]
    %v1925 = vlaneseq
    %v1926 = vshrl.u32 %v1925, 7
    %v1927 = vsub.s32 0, %v1926
    %v1928 = vrot.slane %v1923, %v1927
    %v1931 = vsel %vm269, %v1914, 0
    %1933 = vmatprep.subr.mxu0 0.0
    %1934 = vmatpush1.msra.mxu0 %v1915
    %1935 = vmatprep.subr.mxu0 0.0
    %1936 = vmatpush1.msra.mxu0 %v1916
    %1937 = vmatprep.subr.mxu0 0.0
    %1938 = vmatpush1.msra.mxu0 %v1917
    %1939 = vmatprep.subr.mxu0 0.0
    %1940 = vmatpush1.msra.mxu0 %v1918
    %1941 = vmatprep.subr.mxu0 0.0
    %1942 = vmatpush1.msra.mxu0 %v1919
    %1943 = vmatprep.subr.mxu0 0.0
    %1944 = vmatpush1.msra.mxu0 %v1920
    %1945 = vmatprep.subr.mxu0 0.0
    %1946 = vmatpush1.msra.mxu0 %v1921
    %1947 = vmatprep.subr.mxu0 0.0
    %1948 = vmatpush1.msra.mxu0 %v1922
    %1949 = vmatprep.subr.mxu0 0.0
    %1950 = vmatpush1.msra.mxu0 0.0
    %1951 = vmatprep.subr.mxu0 0.0
    %1952 = vmatpush1.msra.mxu0 0.0
    %1953 = vmatprep.subr.mxu0 0.0
    %1954 = vmatpush1.msra.mxu0 0.0
    %1955 = vmatprep.subr.mxu0 0.0
    %1956 = vmatpush1.msra.mxu0 0.0
    %1957 = vmatprep.subr.mxu0 0.0
    %1958 = vmatpush1.msra.mxu0 0.0
    %1959 = vmatprep.subr.mxu0 0.0
    %1960 = vmatpush1.msra.mxu0 0.0
    %1961 = vmatprep.subr.mxu0 0.0
    %1962 = vmatpush1.msra.mxu0 0.0
    %1963 = vmatprep.subr.mxu0 0.0
    %1964 = vmatpush1.msra.mxu0 0.0
    %1965 = vmatprep.subr.mxu0 0.0
    %1966 = vmatpush1.msra.mxu0 0.0
    %1967 = vmatprep.subr.mxu0 0.0
    %1968 = vmatpush1.msra.mxu0 0.0
    %1969 = vmatprep.subr.mxu0 0.0
    %1970 = vmatpush1.msra.mxu0 0.0
    %1971 = vmatprep.subr.mxu0 0.0
    %1972 = vmatpush1.msra.mxu0 0.0
    %1973 = vmatprep.subr.mxu0 0.0
    %1974 = vmatpush1.msra.mxu0 0.0
    %1975 = vmatprep.subr.mxu0 0.0
    %1976 = vmatpush1.msra.mxu0 0.0
    %1977 = vmatprep.subr.mxu0 0.0
    %1978 = vmatpush1.msra.mxu0 0.0
    %1979 = vmatprep.subr.mxu0 0.0
    %1980 = vmatpush1.msra.mxu0 0.0
    %1981 = vmatprep.subr.mxu0 0.0
    %1982 = vmatpush1.msra.mxu0 0.0
    %1983 = vmatprep.subr.mxu0 0.0
    %1984 = vmatpush1.msra.mxu0 0.0
    %1985 = vmatprep.subr.mxu0 0.0
    %1986 = vmatpush1.msra.mxu0 0.0
    %1987 = vmatprep.subr.mxu0 0.0
    %1988 = vmatpush1.msra.mxu0 0.0
    %1989 = vmatprep.subr.mxu0 0.0
    %1990 = vmatpush1.msra.mxu0 0.0
    %1991 = vmatprep.subr.mxu0 0.0
    %1992 = vmatpush1.msra.mxu0 0.0
    %1993 = vmatprep.subr.mxu0 0.0
    %1994 = vmatpush1.msra.mxu0 0.0
    %1995 = vmatprep.subr.mxu0 0.0
    %1996 = vmatpush1.msra.mxu0 0.0
    %1997 = vmatprep.mubr.f32.mxu0 0.0
    %1998 = vmatmul.mubr.f32.gmra.mrb[0].mxu0 %v1931
    %v1999 = vpop.f32.mrb[0].mxu0
    %v2000 = vadd.f32 %v1928, %v1999
    %v2001 = vpop.f32.mrb[0].mxu0
    %2002 = vdwg.mxu0
    %vm2003 = vcmask 15360
    %v2004 = vsel %vm2003, %v2000, -inf
    %2005 = vmax.xlane.f32.xlu0 %v2004
    %v2006 = vpop.xlane.xlu0 %2005
    %v2007 = vsub.f32 %v2000, %v2006
    %v2008 = vmul.f32 %v2007, 1.442695
    %v2009 = vpow.pop %v2008
    %v2010 = vsel %vm2003, %v2009, 0.0
    %2011 = vadd.xlane.f32.xlu0 %v2010
    %v2012 = vpop.xlane.xlu0 %2011
    %v2013 = vrcp.pop %v2012
    %v2014 = vmul.f32 %v2009, %v2013
    %2015 = vst.msk [vmem:[%s8] sm:$0xff] %vm2003, %v2014
    // Predicated region
    $region38: #{lstm_net_forward.1} parent=1 // pred_check
      _
    $region39: #{lstm_net_forward.1} parent=1 // pred_check_branch
      %2017 = sbr.rel (0) target = $region41
    $region40: #{lstm_net_forward.1} parent=1 // pred_region
      _
    $region41: #{lstm_net_forward.1} parent=1 // pred_fallthru
      _
    // Predicated region
    $region42: #{lstm_net_forward.1} parent=1 // pred_check
      _
    $region43: #{lstm_net_forward.1} parent=1 // pred_check_branch
      %2019 = sbr.rel (0) target = $region45
    $region44: #{lstm_net_forward.1} parent=1 // pred_region
      _
    $region45: #{lstm_net_forward.1} parent=1 // pred_fallthru
      _
    %2020 = vsyncpa [#allocation4], 1

</llo_original>
